<compile_context>
chip_gen: v7x
topology: tpu7x:2x2x1
jax: 0.10.0
libtpu: 0.0.40
codegen_flags: <defaults>
</compile_context>

<pallas_src>
import math
from functools import partial

import jax
import jax.numpy as jnp
from jax import lax
from jax.experimental import pallas as pl
from jax.experimental.pallas import tpu as pltpu  # noqa: F401


# ----------------------------- shared helpers -----------------------------

def _layernorm(x, g, b, eps=1e-5):
    # Matches torch.nn.LayerNorm (biased variance, eps inside sqrt).
    mu = jnp.mean(x, axis=-1, keepdims=True)
    var = jnp.mean((x - mu) ** 2, axis=-1, keepdims=True)
    return (x - mu) * lax.rsqrt(var + eps) * g + b


def _gelu_exact(x):
    # torch.nn.GELU() default = exact erf-based GELU.
    return 0.5 * x * (1.0 + lax.erf(x * (1.0 / math.sqrt(2.0))))


# --------------------------- fused forward kernel ---------------------------

def _vit_forward_kernel(
    x_rows_ref,      # (R, C*P)    patch rows, zero row at every cls position
    w_patch_ref,     # (C*P, H)    Conv1d weight as matmul
    add_ref,         # (R, H)      conv bias + pos embedding (+ cls token at t==0)
    qrow_batch_ref,  # (nh*R, 1)   int32 batch id of each stacked query row
    qrow_head_ref,   # (nh*R, 1)   int32 head id of each stacked query row
    key_batch_ref,   # (1, R)      int32 batch id of each key row
    col_head_ref,    # (1, A)      int32 head id of each attention column
    ln_gb_ref,       # (nb, 4, H)  [ln1_g, ln1_b, ln2_g, ln2_b] per block
    w_qkv_ref,       # (nb, H, 3A) packed W_q|W_k|W_v (no bias)
    w_o_ref,         # (nb, A, H)
    w1_ref,          # (nb, H, M)
    b1_ref,          # (nb, 1, M)
    w2_ref,          # (nb, M, H)
    b2_ref,          # (nb, 1, H)
    head_gb_ref,     # (2, H)      head LayerNorm gamma/beta
    head_w_ref,      # (H, NC)
    head_b_ref,      # (1, NC)
    o_ref,           # (B, NC)
    *, num_heads, num_blks, batch, tokens,
):
    f32 = jnp.float32
    B, T = batch, tokens
    R = B * T
    A = w_o_ref.shape[1]           # dim_attention (= num_hiddens here)
    dh = A // num_heads
    scale = 1.0 / math.sqrt(dh)

    # --- patch embedding + cls token + positional embedding, fully fused ---
    X = jnp.dot(x_rows_ref[...], w_patch_ref[...],
                preferred_element_type=f32) + add_ref[...]           # (R, H)

    # --- attention masks, built ONCE (hoisted out of the unrolled loop) ---
    # Additive batch mask over the (head-stacked row, key) score matrix:
    # rows only attend to keys of the same batch element.
    batch_mask = jnp.where(qrow_batch_ref[...] == key_batch_ref[...],
                           jnp.float32(0.0), jnp.float32(-1e30))     # (nh*R, R)
    # 0/1 head mask: stacked row block h keeps only columns h*dh:(h+1)*dh.
    head_mask = (qrow_head_ref[...] == col_head_ref[...]).astype(f32)  # (nh*R, A)

    # --- transformer blocks: fully unrolled, static weight indexing ---
    for i in range(num_blks):
        ln = ln_gb_ref[i]                                            # (4, H)
        x1 = _layernorm(X, ln[0:1], ln[1:2])

        # Fused QKV: one (R, H) @ (H, 3A) matmul instead of three.
        qkv = jnp.dot(x1, w_qkv_ref[i], preferred_element_type=f32)  # (R, 3A)
        q = qkv[:, 0:A]
        k = qkv[:, A:2 * A]
        v = qkv[:, 2 * A:3 * A]

        # Stack queries head-major along sublanes; the head mask zeroes every
        # column not belonging to that row's head, so a single QK^T contraction
        # over the full A dims yields correct per-head scores.
        q_hm = jnp.concatenate([q] * num_heads, axis=0) * head_mask  # (nh*R, A)
        s = lax.dot_general(q_hm, k, (((1,), (1,)), ((), ())),
                            preferred_element_type=f32) * scale      # (nh*R, R)
        s = s + batch_mask
        s = s - jnp.max(s, axis=-1, keepdims=True)
        p = jnp.exp(s)
        p = p * pl.reciprocal(jnp.sum(p, axis=-1, keepdims=True), approx=True)

        # One PV matmul for all (batch, head); mask off the cross-head columns.
        o_hm = jnp.dot(p, v, preferred_element_type=f32) * head_mask  # (nh*R, A)
        # Combine heads: sum the per-head row blocks (each contributes only its
        # own dh columns) == standard multi-head "concat" result.
        attn = o_hm[0:R]
        for h in range(1, num_heads):
            attn = attn + o_hm[h * R:(h + 1) * R]                     # (R, A)
        attn = jnp.dot(attn, w_o_ref[i], preferred_element_type=f32)  # (R, H)

        y2 = _layernorm(x1 + attn, ln[2:3], ln[3:4])
        h1 = _gelu_exact(
            jnp.dot(y2, w1_ref[i], preferred_element_type=f32) + b1_ref[i])
        mlp = jnp.dot(h1, w2_ref[i], preferred_element_type=f32) + b2_ref[i]
        # TODO(synk): residual is x1 + mlp (not (x1 + attn) + mlp), faithfully
        # matching the PyTorch source:
        #   X = self.ln1(X); return X + self.mlp(self.ln2(X + self.attention(...)))
        X = x1 + mlp

    # --- head: LayerNorm + Linear on the cls rows (static slices, no matmul) ---
    cls_rows = jnp.concatenate([X[b * T:b * T + 1, :] for b in range(B)], axis=0)
    gb = head_gb_ref[...]
    xn = _layernorm(cls_rows, gb[0:1], gb[1:2])
    o_ref[...] = (jnp.dot(xn, head_w_ref[...], preferred_element_type=f32)
                  + head_b_ref[...])


# ------------------------------ full forward ------------------------------

def vit_features_forward(x_ncw, params, *, patch_size, num_heads):
    """x_ncw: (B, C, L) like the torch Conv1d input. Returns (B, num_classes)."""
    B, C, L = x_ncw.shape
    H = params["conv_w"].shape[0]
    NC = params["head_w"].shape[1]
    NP = L // patch_size
    T = NP + 1
    R = B * T
    CP = C * patch_size
    blk = params["blocks"]
    nb = blk["w_qkv"].shape[0]
    A = blk["w_o"].shape[1]
    assert A % num_heads == 0, "dim_attention must be divisible by num_heads"
    dh = A // num_heads

    # ---------- pure layout glue (XLA), no kernel compute hoisted ----------
    # Non-overlapping Conv1d patches, contraction index ordered (channel, pos).
    x_p = (x_ncw.reshape(B, C, NP, patch_size)
                 .transpose(0, 2, 1, 3)
                 .reshape(B, NP, CP))
    # Zero row at each cls position so the patch matmul runs over all R rows.
    x_rows = jnp.concatenate(
        [jnp.zeros((B, 1, CP), jnp.float32), x_p], axis=1).reshape(R, CP)
    w_patch = params["conv_w"].reshape(H, CP).T                      # (CP, H)
    pos = params["pos_embedding"][0]                                 # (T, H)
    # Additive term per row: cls+pos[0] for t==0, conv_bias+pos[t] otherwise.
    add_rows = jnp.concatenate(
        [params["cls_token"].reshape(1, H) + pos[0:1],
         pos[1:] + params["conv_b"][None, :]], axis=0)               # (T, H)
    add_rows = jnp.tile(add_rows, (B, 1))                            # (R, H)

    # Tiny O(num_heads*R) id vectors; the (nh*R, R)/(nh*R, A) masks are built
    # in-kernel (no quadratic mask array shipped from HBM).
    nhR = num_heads * R
    qrow_batch = jnp.tile(jnp.repeat(jnp.arange(B, dtype=jnp.int32), T),
                          num_heads).reshape(nhR, 1)
    qrow_head = jnp.repeat(jnp.arange(num_heads, dtype=jnp.int32),
                           R).reshape(nhR, 1)
    key_batch = jnp.repeat(jnp.arange(B, dtype=jnp.int32), T).reshape(1, R)
    col_head = jnp.repeat(jnp.arange(num_heads, dtype=jnp.int32),
                          dh).reshape(1, A)

    kernel = partial(_vit_forward_kernel, num_heads=num_heads, num_blks=nb,
                     batch=B, tokens=T)
    return pl.pallas_call(
        kernel,
        out_shape=jax.ShapeDtypeStruct((B, NC), jnp.float32),
    )(x_rows, w_patch, add_rows, qrow_batch, qrow_head, key_batch, col_head,
      blk["ln_gb"], blk["w_qkv"], blk["w_o"],
      blk["w1"], blk["b1"], blk["w2"], blk["b2"],
      params["head_gb"], params["head_w"], params["head_b"])


# ------------------------------ parameters ------------------------------

def init_params(key, *, in_channels, vect_size, patch_size, num_hiddens,
                mlp_num_hiddens, num_heads, num_blks, num_classes):
    del num_heads  # head count only affects forward reshape, not param shapes
    H, M = num_hiddens, mlp_num_hiddens
    NP = vect_size // patch_size
    std = 0.02
    k_conv, k_pos, k_head, kq, ko, k1, k2 = jax.random.split(key, 7)
    ln_unit = jnp.concatenate([jnp.ones((1, H)), jnp.zeros((1, H)),
                               jnp.ones((1, H)), jnp.zeros((1, H))], axis=0)
    return {
        "conv_w": std * jax.random.normal(k_conv, (H, in_channels, patch_size),
                                          jnp.float32),
        "conv_b": jnp.zeros((H,), jnp.float32),
        "cls_token": jnp.zeros((1, 1, H), jnp.float32),               # torch.zeros
        "pos_embedding": jax.random.normal(k_pos, (1, NP + 1, H), jnp.float32),
        "head_gb": jnp.concatenate([jnp.ones((1, H)), jnp.zeros((1, H))], axis=0),
        "head_w": std * jax.random.normal(k_head, (H, num_classes), jnp.float32),
        "head_b": jnp.zeros((1, num_classes), jnp.float32),
        "blocks": {
            # stacked per-block weights (leading num_blks axis)
            "ln_gb": jnp.tile(ln_unit[None], (num_blks, 1, 1)).astype(jnp.float32),
            "w_qkv": std * jax.random.normal(kq, (num_blks, H, 3 * H), jnp.float32),
            "w_o":   std * jax.random.normal(ko, (num_blks, H, H), jnp.float32),
            "w1":    std * jax.random.normal(k1, (num_blks, H, M), jnp.float32),
            "b1":    jnp.zeros((num_blks, 1, M), jnp.float32),
            "w2":    std * jax.random.normal(k2, (num_blks, M, H), jnp.float32),
            "b2":    jnp.zeros((num_blks, 1, H), jnp.float32),
        },
    }


# --------------------------- pure-JAX reference ---------------------------

def _reference_forward(x_ncw, params, *, patch_size, num_heads):
    B, C, L = x_ncw.shape
    H = params["conv_w"].shape[0]
    NP = L // patch_size
    x_p = (x_ncw.reshape(B, C, NP, patch_size)
                 .transpose(0, 2, 1, 3)
                 .reshape(B, NP, C * patch_size))
    emb = x_p @ params["conv_w"].reshape(H, -1).T + params["conv_b"]
    cls = jnp.broadcast_to(params["cls_token"], (B, 1, H))
    X = jnp.concatenate([cls, emb], axis=1) + params["pos_embedding"]

    def ln(x, g, b):
        mu = x.mean(-1, keepdims=True)
        var = ((x - mu) ** 2).mean(-1, keepdims=True)
        return (x - mu) / jnp.sqrt(var + 1e-5) * g + b

    blk = params["blocks"]
    nb = blk["w_qkv"].shape[0]
    A = blk["w_o"].shape[1]
    dh = A // num_heads
    for i in range(nb):
        g1, b1, g2, b2 = blk["ln_gb"][i]
        x1 = ln(X, g1, b1)
        qkv = x1 @ blk["w_qkv"][i]
        q, k, v = qkv[..., :A], qkv[..., A:2 * A], qkv[..., 2 * A:]

        def split(t):
            return t.reshape(B, -1, num_heads, dh).transpose(0, 2, 1, 3)
        qh, kh, vh = split(q), split(k), split(v)
        s = jnp.einsum("bhqd,bhkd->bhqk", qh, kh) / math.sqrt(dh)
        p = jax.nn.softmax(s, axis=-1)
        o = (jnp.einsum("bhqk,bhkd->bhqd", p, vh)
             .transpose(0, 2, 1, 3).reshape(B, -1, A))
        attn = o @ blk["w_o"][i]
        y2 = ln(x1 + attn, g2, b2)
        h1 = jax.nn.gelu(y2 @ blk["w1"][i] + blk["b1"][i], approximate=False)
        X = x1 + (h1 @ blk["w2"][i] + blk["b2"][i])
    cls_out = X[:, 0]
    hg, hb = params["head_gb"][0], params["head_gb"][1]
    return ln(cls_out, hg, hb) @ params["head_w"] + params["head_b"]


# --------------------------------- main ---------------------------------

if __name__ == "__main__":
    B, C = 2, 4
    vect_size, patch_size = 64, 8          # num_patches = 8, seq len = 9 (with cls)
    num_hiddens, mlp_num_hiddens = 32, 64
    num_heads, num_blks, num_classes = 4, 2, 10

    key = jax.random.PRNGKey(0)
    kx, kp = jax.random.split(key)
    x = jax.random.normal(kx, (B, C, vect_size), jnp.float32)  # NCW Conv1d layout
    params = init_params(
        kp, in_channels=C, vect_size=vect_size, patch_size=patch_size,
        num_hiddens=num_hiddens, mlp_num_hiddens=mlp_num_hiddens,
        num_heads=num_heads, num_blks=num_blks, num_classes=num_classes,
    )

    fwd = jax.jit(partial(vit_features_forward,
                          patch_size=patch_size, num_heads=num_heads))
    out = jax.block_until_ready(fwd(x, params))
    assert out.shape == (B, num_classes), out.shape
    assert bool(jnp.all(jnp.isfinite(out)))

    ref = _reference_forward(x, params, patch_size=patch_size, num_heads=num_heads)
    assert jnp.allclose(out, ref, atol=2e-2, rtol=2e-2), \
        float(jnp.max(jnp.abs(out - ref)))
    print("KERNEL_OK")
</pallas_src>

<mosaic_0001>
module attributes {stable_mosaic.version = 11 : i64} {
  func.func @_vit_forward_kernel(%arg0: memref<18x32xf32, #tpu.memory_space<vmem>>, %arg1: memref<32x32xf32, #tpu.memory_space<vmem>>, %arg2: memref<18x32xf32, #tpu.memory_space<vmem>>, %arg3: memref<72x1xi32, #tpu.memory_space<vmem>>, %arg4: memref<72x1xi32, #tpu.memory_space<vmem>>, %arg5: memref<1x18xi32, #tpu.memory_space<vmem>>, %arg6: memref<1x32xi32, #tpu.memory_space<vmem>>, %arg7: memref<2x4x32xf32, #tpu.memory_space<vmem>>, %arg8: memref<2x32x96xf32, #tpu.memory_space<vmem>>, %arg9: memref<2x32x32xf32, #tpu.memory_space<vmem>>, %arg10: memref<2x32x64xf32, #tpu.memory_space<vmem>>, %arg11: memref<2x1x64xf32, #tpu.memory_space<vmem>>, %arg12: memref<2x64x32xf32, #tpu.memory_space<vmem>>, %arg13: memref<2x1x32xf32, #tpu.memory_space<vmem>>, %arg14: memref<2x32xf32, #tpu.memory_space<vmem>>, %arg15: memref<32x10xf32, #tpu.memory_space<vmem>>, %arg16: memref<1x10xf32, #tpu.memory_space<vmem>>, %arg17: memref<2x10xf32, #tpu.memory_space<vmem>>) attributes {dimension_semantics = [], scalar_prefetch = 0 : i64, scratch_operands = 0 : i64, tpu.core_type = #tpu.core_type<tc>} {
    %c0 = arith.constant 0 : index
    %c0_0 = arith.constant 0 : index
    %0 = vector.load %arg0[%c0, %c0_0] : memref<18x32xf32, #tpu.memory_space<vmem>>, vector<18x32xf32>
    %c0_1 = arith.constant 0 : index
    %c0_2 = arith.constant 0 : index
    %1 = vector.load %arg1[%c0_1, %c0_2] : memref<32x32xf32, #tpu.memory_space<vmem>>, vector<32x32xf32>
    %cst = arith.constant dense<0.000000e+00> : vector<18x32xf32>
    %2 = tpu.matmul %0, %1, %cst {dimension_numbers = #tpu.dot_dimension_numbers<[1], [0], [0], [1], [0, 0, 1, 1], [], []>} : vector<18x32xf32>, vector<32x32xf32>, vector<18x32xf32> -> vector<18x32xf32>
    %c0_3 = arith.constant 0 : index
    %c0_4 = arith.constant 0 : index
    %3 = vector.load %arg2[%c0_3, %c0_4] : memref<18x32xf32, #tpu.memory_space<vmem>>, vector<18x32xf32>
    %4 = arith.addf %2, %3 : vector<18x32xf32>
    %c0_5 = arith.constant 0 : index
    %c0_6 = arith.constant 0 : index
    %5 = vector.load %arg3[%c0_5, %c0_6] : memref<72x1xi32, #tpu.memory_space<vmem>>, vector<72x1xi32>
    %c0_7 = arith.constant 0 : index
    %c0_8 = arith.constant 0 : index
    %6 = vector.load %arg5[%c0_7, %c0_8] : memref<1x18xi32, #tpu.memory_space<vmem>>, vector<1x18xi32>
    %7 = vector.broadcast %5 : vector<72x1xi32> to vector<72x18xi32>
    %8 = vector.broadcast %6 : vector<1x18xi32> to vector<72x18xi32>
    %9 = arith.cmpi eq, %7, %8 : vector<72x18xi32>
    %cst_9 = arith.constant 0.000000e+00 : f32
    %cst_10 = arith.constant -1.000000e+30 : f32
    %10 = vector.broadcast %cst_9 : f32 to vector<72x18xf32>
    %11 = vector.broadcast %cst_10 : f32 to vector<72x18xf32>
    %12 = arith.select %9, %10, %11 : vector<72x18xi1>, vector<72x18xf32>
    %c0_11 = arith.constant 0 : index
    %c0_12 = arith.constant 0 : index
    %13 = vector.load %arg4[%c0_11, %c0_12] : memref<72x1xi32, #tpu.memory_space<vmem>>, vector<72x1xi32>
    %c0_13 = arith.constant 0 : index
    %c0_14 = arith.constant 0 : index
    %14 = vector.load %arg6[%c0_13, %c0_14] : memref<1x32xi32, #tpu.memory_space<vmem>>, vector<1x32xi32>
    %15 = vector.broadcast %13 : vector<72x1xi32> to vector<72x32xi32>
    %16 = vector.broadcast %14 : vector<1x32xi32> to vector<72x32xi32>
    %17 = arith.cmpi eq, %15, %16 : vector<72x32xi32>
    %18 = arith.extui %17 : vector<72x32xi1> to vector<72x32xi32>
    %19 = arith.sitofp %18 : vector<72x32xi32> to vector<72x32xf32>
    %c0_15 = arith.constant 0 : index
    %c0_16 = arith.constant 0 : index
    %c0_17 = arith.constant 0 : index
    %20 = vector.load %arg7[%c0_15, %c0_16, %c0_17] : memref<2x4x32xf32, #tpu.memory_space<vmem>>, vector<1x4x32xf32>
    %21 = vector.shape_cast %20 : vector<1x4x32xf32> to vector<4x32xf32>
    %22 = vector.extract_strided_slice %21 {offsets = [0, 0], sizes = [1, 32], strides = [1, 1]} : vector<4x32xf32> to vector<1x32xf32>
    %23 = vector.extract_strided_slice %21 {offsets = [1, 0], sizes = [1, 32], strides = [1, 1]} : vector<4x32xf32> to vector<1x32xf32>
    %cst_18 = arith.constant dense<0.000000e+00> : vector<18xf32>
    %24 = vector.multi_reduction <add>, %4, %cst_18 [1] : vector<18x32xf32> to vector<18xf32>
    %25 = vector.shape_cast %24 : vector<18xf32> to vector<18x1xf32>
    %cst_19 = arith.constant 3.200000e+01 : f32
    %26 = vector.broadcast %cst_19 : f32 to vector<18x1xf32>
    %27 = arith.divf %25, %26 : vector<18x1xf32>
    %28 = vector.broadcast %27 : vector<18x1xf32> to vector<18x32xf32>
    %29 = arith.subf %4, %28 : vector<18x32xf32>
    %30 = arith.mulf %29, %29 : vector<18x32xf32>
    %cst_20 = arith.constant dense<0.000000e+00> : vector<18xf32>
    %31 = vector.multi_reduction <add>, %30, %cst_20 [1] : vector<18x32xf32> to vector<18xf32>
    %32 = vector.shape_cast %31 : vector<18xf32> to vector<18x1xf32>
    %cst_21 = arith.constant 3.200000e+01 : f32
    %33 = vector.broadcast %cst_21 : f32 to vector<18x1xf32>
    %34 = arith.divf %32, %33 : vector<18x1xf32>
    %35 = vector.broadcast %27 : vector<18x1xf32> to vector<18x32xf32>
    %36 = arith.subf %4, %35 : vector<18x32xf32>
    %cst_22 = arith.constant 9.99999974E-6 : f32
    %37 = vector.broadcast %cst_22 : f32 to vector<18x1xf32>
    %38 = arith.addf %34, %37 : vector<18x1xf32>
    %39 = math.rsqrt %38 : vector<18x1xf32>
    %40 = vector.broadcast %39 : vector<18x1xf32> to vector<18x32xf32>
    %41 = arith.mulf %36, %40 : vector<18x32xf32>
    %42 = vector.broadcast %22 : vector<1x32xf32> to vector<18x32xf32>
    %43 = arith.mulf %41, %42 : vector<18x32xf32>
    %44 = vector.broadcast %23 : vector<1x32xf32> to vector<18x32xf32>
    %45 = arith.addf %43, %44 : vector<18x32xf32>
    %c0_23 = arith.constant 0 : index
    %c0_24 = arith.constant 0 : index
    %c0_25 = arith.constant 0 : index
    %46 = vector.load %arg8[%c0_23, %c0_24, %c0_25] : memref<2x32x96xf32, #tpu.memory_space<vmem>>, vector<1x32x96xf32>
    %47 = vector.shape_cast %46 : vector<1x32x96xf32> to vector<32x96xf32>
    %cst_26 = arith.constant dense<0.000000e+00> : vector<18x96xf32>
    %48 = tpu.matmul %45, %47, %cst_26 {dimension_numbers = #tpu.dot_dimension_numbers<[1], [0], [0], [1], [0, 0, 1, 1], [], []>} : vector<18x32xf32>, vector<32x96xf32>, vector<18x96xf32> -> vector<18x96xf32>
    %49 = vector.extract_strided_slice %48 {offsets = [0, 0], sizes = [18, 32], strides = [1, 1]} : vector<18x96xf32> to vector<18x32xf32>
    %50 = vector.extract_strided_slice %48 {offsets = [0, 32], sizes = [18, 32], strides = [1, 1]} : vector<18x96xf32> to vector<18x32xf32>
    %51 = vector.extract_strided_slice %48 {offsets = [0, 64], sizes = [18, 32], strides = [1, 1]} : vector<18x96xf32> to vector<18x32xf32>
    %52 = tpu.concatenate %49, %49, %49, %49 in 0 : vector<18x32xf32>, vector<18x32xf32>, vector<18x32xf32>, vector<18x32xf32> -> vector<72x32xf32>
    %53 = arith.mulf %52, %19 : vector<72x32xf32>
    %cst_27 = arith.constant dense<0.000000e+00> : vector<72x18xf32>
    %54 = tpu.matmul %53, %50, %cst_27 {dimension_numbers = #tpu.dot_dimension_numbers<[1], [1], [0], [0], [0, 0, 1, 0], [], []>} : vector<72x32xf32>, vector<18x32xf32>, vector<72x18xf32> -> vector<72x18xf32>
    %cst_28 = arith.constant 0.353553385 : f32
    %55 = vector.broadcast %cst_28 : f32 to vector<72x18xf32>
    %56 = arith.mulf %54, %55 : vector<72x18xf32>
    %57 = arith.addf %56, %12 : vector<72x18xf32>
    %cst_29 = arith.constant dense<0xFF800000> : vector<72xf32>
    %58 = vector.multi_reduction <maximumf>, %57, %cst_29 [1] : vector<72x18xf32> to vector<72xf32>
    %59 = vector.shape_cast %58 : vector<72xf32> to vector<72x1xf32>
    %60 = vector.broadcast %59 : vector<72x1xf32> to vector<72x18xf32>
    %61 = arith.subf %57, %60 : vector<72x18xf32>
    %62 = math.exp %61 : vector<72x18xf32>
    %cst_30 = arith.constant dense<0.000000e+00> : vector<72xf32>
    %63 = vector.multi_reduction <add>, %62, %cst_30 [1] : vector<72x18xf32> to vector<72xf32>
    %64 = vector.shape_cast %63 : vector<72xf32> to vector<72x1xf32>
    %65 = tpu.reciprocal %64 {approx = true} : vector<72x1xf32> -> vector<72x1xf32>
    %66 = vector.broadcast %65 : vector<72x1xf32> to vector<72x18xf32>
    %67 = arith.mulf %62, %66 : vector<72x18xf32>
    %cst_31 = arith.constant dense<0.000000e+00> : vector<72x32xf32>
    %68 = tpu.matmul %67, %51, %cst_31 {dimension_numbers = #tpu.dot_dimension_numbers<[1], [0], [0], [1], [0, 0, 1, 1], [], []>} : vector<72x18xf32>, vector<18x32xf32>, vector<72x32xf32> -> vector<72x32xf32>
    %69 = arith.mulf %68, %19 : vector<72x32xf32>
    %70 = vector.extract_strided_slice %69 {offsets = [0, 0], sizes = [18, 32], strides = [1, 1]} : vector<72x32xf32> to vector<18x32xf32>
    %71 = vector.extract_strided_slice %69 {offsets = [18, 0], sizes = [18, 32], strides = [1, 1]} : vector<72x32xf32> to vector<18x32xf32>
    %72 = arith.addf %70, %71 : vector<18x32xf32>
    %73 = vector.extract_strided_slice %69 {offsets = [36, 0], sizes = [18, 32], strides = [1, 1]} : vector<72x32xf32> to vector<18x32xf32>
    %74 = arith.addf %72, %73 : vector<18x32xf32>
    %75 = vector.extract_strided_slice %69 {offsets = [54, 0], sizes = [18, 32], strides = [1, 1]} : vector<72x32xf32> to vector<18x32xf32>
    %76 = arith.addf %74, %75 : vector<18x32xf32>
    %c0_32 = arith.constant 0 : index
    %c0_33 = arith.constant 0 : index
    %c0_34 = arith.constant 0 : index
    %77 = vector.load %arg9[%c0_32, %c0_33, %c0_34] : memref<2x32x32xf32, #tpu.memory_space<vmem>>, vector<1x32x32xf32>
    %78 = vector.shape_cast %77 : vector<1x32x32xf32> to vector<32x32xf32>
    %cst_35 = arith.constant dense<0.000000e+00> : vector<18x32xf32>
    %79 = tpu.matmul %76, %78, %cst_35 {dimension_numbers = #tpu.dot_dimension_numbers<[1], [0], [0], [1], [0, 0, 1, 1], [], []>} : vector<18x32xf32>, vector<32x32xf32>, vector<18x32xf32> -> vector<18x32xf32>
    %80 = arith.addf %45, %79 : vector<18x32xf32>
    %81 = vector.extract_strided_slice %21 {offsets = [2, 0], sizes = [1, 32], strides = [1, 1]} : vector<4x32xf32> to vector<1x32xf32>
    %82 = vector.extract_strided_slice %21 {offsets = [3, 0], sizes = [1, 32], strides = [1, 1]} : vector<4x32xf32> to vector<1x32xf32>
    %cst_36 = arith.constant dense<0.000000e+00> : vector<18xf32>
    %83 = vector.multi_reduction <add>, %80, %cst_36 [1] : vector<18x32xf32> to vector<18xf32>
    %84 = vector.shape_cast %83 : vector<18xf32> to vector<18x1xf32>
    %cst_37 = arith.constant 3.200000e+01 : f32
    %85 = vector.broadcast %cst_37 : f32 to vector<18x1xf32>
    %86 = arith.divf %84, %85 : vector<18x1xf32>
    %87 = vector.broadcast %86 : vector<18x1xf32> to vector<18x32xf32>
    %88 = arith.subf %80, %87 : vector<18x32xf32>
    %89 = arith.mulf %88, %88 : vector<18x32xf32>
    %cst_38 = arith.constant dense<0.000000e+00> : vector<18xf32>
    %90 = vector.multi_reduction <add>, %89, %cst_38 [1] : vector<18x32xf32> to vector<18xf32>
    %91 = vector.shape_cast %90 : vector<18xf32> to vector<18x1xf32>
    %cst_39 = arith.constant 3.200000e+01 : f32
    %92 = vector.broadcast %cst_39 : f32 to vector<18x1xf32>
    %93 = arith.divf %91, %92 : vector<18x1xf32>
    %94 = vector.broadcast %86 : vector<18x1xf32> to vector<18x32xf32>
    %95 = arith.subf %80, %94 : vector<18x32xf32>
    %cst_40 = arith.constant 9.99999974E-6 : f32
    %96 = vector.broadcast %cst_40 : f32 to vector<18x1xf32>
    %97 = arith.addf %93, %96 : vector<18x1xf32>
    %98 = math.rsqrt %97 : vector<18x1xf32>
    %99 = vector.broadcast %98 : vector<18x1xf32> to vector<18x32xf32>
    %100 = arith.mulf %95, %99 : vector<18x32xf32>
    %101 = vector.broadcast %81 : vector<1x32xf32> to vector<18x32xf32>
    %102 = arith.mulf %100, %101 : vector<18x32xf32>
    %103 = vector.broadcast %82 : vector<1x32xf32> to vector<18x32xf32>
    %104 = arith.addf %102, %103 : vector<18x32xf32>
    %c0_41 = arith.constant 0 : index
    %c0_42 = arith.constant 0 : index
    %c0_43 = arith.constant 0 : index
    %105 = vector.load %arg10[%c0_41, %c0_42, %c0_43] : memref<2x32x64xf32, #tpu.memory_space<vmem>>, vector<1x32x64xf32>
    %106 = vector.shape_cast %105 : vector<1x32x64xf32> to vector<32x64xf32>
    %cst_44 = arith.constant dense<0.000000e+00> : vector<18x64xf32>
    %107 = tpu.matmul %104, %106, %cst_44 {dimension_numbers = #tpu.dot_dimension_numbers<[1], [0], [0], [1], [0, 0, 1, 1], [], []>} : vector<18x32xf32>, vector<32x64xf32>, vector<18x64xf32> -> vector<18x64xf32>
    %c0_45 = arith.constant 0 : index
    %c0_46 = arith.constant 0 : index
    %c0_47 = arith.constant 0 : index
    %108 = vector.load %arg11[%c0_45, %c0_46, %c0_47] : memref<2x1x64xf32, #tpu.memory_space<vmem>>, vector<1x1x64xf32>
    %109 = vector.shape_cast %108 : vector<1x1x64xf32> to vector<1x64xf32>
    %110 = vector.broadcast %109 : vector<1x64xf32> to vector<18x64xf32>
    %111 = arith.addf %107, %110 : vector<18x64xf32>
    %cst_48 = arith.constant 5.000000e-01 : f32
    %112 = vector.broadcast %cst_48 : f32 to vector<18x64xf32>
    %113 = arith.mulf %112, %111 : vector<18x64xf32>
    %cst_49 = arith.constant 0.707106769 : f32
    %114 = vector.broadcast %cst_49 : f32 to vector<18x64xf32>
    %115 = arith.mulf %111, %114 : vector<18x64xf32>
    %116 = math.erf %115 : vector<18x64xf32>
    %cst_50 = arith.constant 1.000000e+00 : f32
    %117 = vector.broadcast %cst_50 : f32 to vector<18x64xf32>
    %118 = arith.addf %117, %116 : vector<18x64xf32>
    %119 = arith.mulf %113, %118 : vector<18x64xf32>
    %c0_51 = arith.constant 0 : index
    %c0_52 = arith.constant 0 : index
    %c0_53 = arith.constant 0 : index
    %120 = vector.load %arg12[%c0_51, %c0_52, %c0_53] : memref<2x64x32xf32, #tpu.memory_space<vmem>>, vector<1x64x32xf32>
    %121 = vector.shape_cast %120 : vector<1x64x32xf32> to vector<64x32xf32>
    %cst_54 = arith.constant dense<0.000000e+00> : vector<18x32xf32>
    %122 = tpu.matmul %119, %121, %cst_54 {dimension_numbers = #tpu.dot_dimension_numbers<[1], [0], [0], [1], [0, 0, 1, 1], [], []>} : vector<18x64xf32>, vector<64x32xf32>, vector<18x32xf32> -> vector<18x32xf32>
    %c0_55 = arith.constant 0 : index
    %c0_56 = arith.constant 0 : index
    %c0_57 = arith.constant 0 : index
    %123 = vector.load %arg13[%c0_55, %c0_56, %c0_57] : memref<2x1x32xf32, #tpu.memory_space<vmem>>, vector<1x1x32xf32>
    %124 = vector.shape_cast %123 : vector<1x1x32xf32> to vector<1x32xf32>
    %125 = vector.broadcast %124 : vector<1x32xf32> to vector<18x32xf32>
    %126 = arith.addf %122, %125 : vector<18x32xf32>
    %127 = arith.addf %45, %126 : vector<18x32xf32>
    %c1 = arith.constant 1 : index
    %c0_58 = arith.constant 0 : index
    %c0_59 = arith.constant 0 : index
    %128 = vector.load %arg7[%c1, %c0_58, %c0_59] : memref<2x4x32xf32, #tpu.memory_space<vmem>>, vector<1x4x32xf32>
    %129 = vector.shape_cast %128 : vector<1x4x32xf32> to vector<4x32xf32>
    %130 = vector.extract_strided_slice %129 {offsets = [0, 0], sizes = [1, 32], strides = [1, 1]} : vector<4x32xf32> to vector<1x32xf32>
    %131 = vector.extract_strided_slice %129 {offsets = [1, 0], sizes = [1, 32], strides = [1, 1]} : vector<4x32xf32> to vector<1x32xf32>
    %cst_60 = arith.constant dense<0.000000e+00> : vector<18xf32>
    %132 = vector.multi_reduction <add>, %127, %cst_60 [1] : vector<18x32xf32> to vector<18xf32>
    %133 = vector.shape_cast %132 : vector<18xf32> to vector<18x1xf32>
    %cst_61 = arith.constant 3.200000e+01 : f32
    %134 = vector.broadcast %cst_61 : f32 to vector<18x1xf32>
    %135 = arith.divf %133, %134 : vector<18x1xf32>
    %136 = vector.broadcast %135 : vector<18x1xf32> to vector<18x32xf32>
    %137 = arith.subf %127, %136 : vector<18x32xf32>
    %138 = arith.mulf %137, %137 : vector<18x32xf32>
    %cst_62 = arith.constant dense<0.000000e+00> : vector<18xf32>
    %139 = vector.multi_reduction <add>, %138, %cst_62 [1] : vector<18x32xf32> to vector<18xf32>
    %140 = vector.shape_cast %139 : vector<18xf32> to vector<18x1xf32>
    %cst_63 = arith.constant 3.200000e+01 : f32
    %141 = vector.broadcast %cst_63 : f32 to vector<18x1xf32>
    %142 = arith.divf %140, %141 : vector<18x1xf32>
    %143 = vector.broadcast %135 : vector<18x1xf32> to vector<18x32xf32>
    %144 = arith.subf %127, %143 : vector<18x32xf32>
    %cst_64 = arith.constant 9.99999974E-6 : f32
    %145 = vector.broadcast %cst_64 : f32 to vector<18x1xf32>
    %146 = arith.addf %142, %145 : vector<18x1xf32>
    %147 = math.rsqrt %146 : vector<18x1xf32>
    %148 = vector.broadcast %147 : vector<18x1xf32> to vector<18x32xf32>
    %149 = arith.mulf %144, %148 : vector<18x32xf32>
    %150 = vector.broadcast %130 : vector<1x32xf32> to vector<18x32xf32>
    %151 = arith.mulf %149, %150 : vector<18x32xf32>
    %152 = vector.broadcast %131 : vector<1x32xf32> to vector<18x32xf32>
    %153 = arith.addf %151, %152 : vector<18x32xf32>
    %c1_65 = arith.constant 1 : index
    %c0_66 = arith.constant 0 : index
    %c0_67 = arith.constant 0 : index
    %154 = vector.load %arg8[%c1_65, %c0_66, %c0_67] : memref<2x32x96xf32, #tpu.memory_space<vmem>>, vector<1x32x96xf32>
    %155 = vector.shape_cast %154 : vector<1x32x96xf32> to vector<32x96xf32>
    %cst_68 = arith.constant dense<0.000000e+00> : vector<18x96xf32>
    %156 = tpu.matmul %153, %155, %cst_68 {dimension_numbers = #tpu.dot_dimension_numbers<[1], [0], [0], [1], [0, 0, 1, 1], [], []>} : vector<18x32xf32>, vector<32x96xf32>, vector<18x96xf32> -> vector<18x96xf32>
    %157 = vector.extract_strided_slice %156 {offsets = [0, 0], sizes = [18, 32], strides = [1, 1]} : vector<18x96xf32> to vector<18x32xf32>
    %158 = vector.extract_strided_slice %156 {offsets = [0, 32], sizes = [18, 32], strides = [1, 1]} : vector<18x96xf32> to vector<18x32xf32>
    %159 = vector.extract_strided_slice %156 {offsets = [0, 64], sizes = [18, 32], strides = [1, 1]} : vector<18x96xf32> to vector<18x32xf32>
    %160 = tpu.concatenate %157, %157, %157, %157 in 0 : vector<18x32xf32>, vector<18x32xf32>, vector<18x32xf32>, vector<18x32xf32> -> vector<72x32xf32>
    %161 = arith.mulf %160, %19 : vector<72x32xf32>
    %cst_69 = arith.constant dense<0.000000e+00> : vector<72x18xf32>
    %162 = tpu.matmul %161, %158, %cst_69 {dimension_numbers = #tpu.dot_dimension_numbers<[1], [1], [0], [0], [0, 0, 1, 0], [], []>} : vector<72x32xf32>, vector<18x32xf32>, vector<72x18xf32> -> vector<72x18xf32>
    %cst_70 = arith.constant 0.353553385 : f32
    %163 = vector.broadcast %cst_70 : f32 to vector<72x18xf32>
    %164 = arith.mulf %162, %163 : vector<72x18xf32>
    %165 = arith.addf %164, %12 : vector<72x18xf32>
    %cst_71 = arith.constant dense<0xFF800000> : vector<72xf32>
    %166 = vector.multi_reduction <maximumf>, %165, %cst_71 [1] : vector<72x18xf32> to vector<72xf32>
    %167 = vector.shape_cast %166 : vector<72xf32> to vector<72x1xf32>
    %168 = vector.broadcast %167 : vector<72x1xf32> to vector<72x18xf32>
    %169 = arith.subf %165, %168 : vector<72x18xf32>
    %170 = math.exp %169 : vector<72x18xf32>
    %cst_72 = arith.constant dense<0.000000e+00> : vector<72xf32>
    %171 = vector.multi_reduction <add>, %170, %cst_72 [1] : vector<72x18xf32> to vector<72xf32>
    %172 = vector.shape_cast %171 : vector<72xf32> to vector<72x1xf32>
    %173 = tpu.reciprocal %172 {approx = true} : vector<72x1xf32> -> vector<72x1xf32>
    %174 = vector.broadcast %173 : vector<72x1xf32> to vector<72x18xf32>
    %175 = arith.mulf %170, %174 : vector<72x18xf32>
    %cst_73 = arith.constant dense<0.000000e+00> : vector<72x32xf32>
    %176 = tpu.matmul %175, %159, %cst_73 {dimension_numbers = #tpu.dot_dimension_numbers<[1], [0], [0], [1], [0, 0, 1, 1], [], []>} : vector<72x18xf32>, vector<18x32xf32>, vector<72x32xf32> -> vector<72x32xf32>
    %177 = arith.mulf %176, %19 : vector<72x32xf32>
    %178 = vector.extract_strided_slice %177 {offsets = [0, 0], sizes = [18, 32], strides = [1, 1]} : vector<72x32xf32> to vector<18x32xf32>
    %179 = vector.extract_strided_slice %177 {offsets = [18, 0], sizes = [18, 32], strides = [1, 1]} : vector<72x32xf32> to vector<18x32xf32>
    %180 = arith.addf %178, %179 : vector<18x32xf32>
    %181 = vector.extract_strided_slice %177 {offsets = [36, 0], sizes = [18, 32], strides = [1, 1]} : vector<72x32xf32> to vector<18x32xf32>
    %182 = arith.addf %180, %181 : vector<18x32xf32>
    %183 = vector.extract_strided_slice %177 {offsets = [54, 0], sizes = [18, 32], strides = [1, 1]} : vector<72x32xf32> to vector<18x32xf32>
    %184 = arith.addf %182, %183 : vector<18x32xf32>
    %c1_74 = arith.constant 1 : index
    %c0_75 = arith.constant 0 : index
    %c0_76 = arith.constant 0 : index
    %185 = vector.load %arg9[%c1_74, %c0_75, %c0_76] : memref<2x32x32xf32, #tpu.memory_space<vmem>>, vector<1x32x32xf32>
    %186 = vector.shape_cast %185 : vector<1x32x32xf32> to vector<32x32xf32>
    %cst_77 = arith.constant dense<0.000000e+00> : vector<18x32xf32>
    %187 = tpu.matmul %184, %186, %cst_77 {dimension_numbers = #tpu.dot_dimension_numbers<[1], [0], [0], [1], [0, 0, 1, 1], [], []>} : vector<18x32xf32>, vector<32x32xf32>, vector<18x32xf32> -> vector<18x32xf32>
    %188 = arith.addf %153, %187 : vector<18x32xf32>
    %189 = vector.extract_strided_slice %129 {offsets = [2, 0], sizes = [1, 32], strides = [1, 1]} : vector<4x32xf32> to vector<1x32xf32>
    %190 = vector.extract_strided_slice %129 {offsets = [3, 0], sizes = [1, 32], strides = [1, 1]} : vector<4x32xf32> to vector<1x32xf32>
    %cst_78 = arith.constant dense<0.000000e+00> : vector<18xf32>
    %191 = vector.multi_reduction <add>, %188, %cst_78 [1] : vector<18x32xf32> to vector<18xf32>
    %192 = vector.shape_cast %191 : vector<18xf32> to vector<18x1xf32>
    %cst_79 = arith.constant 3.200000e+01 : f32
    %193 = vector.broadcast %cst_79 : f32 to vector<18x1xf32>
    %194 = arith.divf %192, %193 : vector<18x1xf32>
    %195 = vector.broadcast %194 : vector<18x1xf32> to vector<18x32xf32>
    %196 = arith.subf %188, %195 : vector<18x32xf32>
    %197 = arith.mulf %196, %196 : vector<18x32xf32>
    %cst_80 = arith.constant dense<0.000000e+00> : vector<18xf32>
    %198 = vector.multi_reduction <add>, %197, %cst_80 [1] : vector<18x32xf32> to vector<18xf32>
    %199 = vector.shape_cast %198 : vector<18xf32> to vector<18x1xf32>
    %cst_81 = arith.constant 3.200000e+01 : f32
    %200 = vector.broadcast %cst_81 : f32 to vector<18x1xf32>
    %201 = arith.divf %199, %200 : vector<18x1xf32>
    %202 = vector.broadcast %194 : vector<18x1xf32> to vector<18x32xf32>
    %203 = arith.subf %188, %202 : vector<18x32xf32>
    %cst_82 = arith.constant 9.99999974E-6 : f32
    %204 = vector.broadcast %cst_82 : f32 to vector<18x1xf32>
    %205 = arith.addf %201, %204 : vector<18x1xf32>
    %206 = math.rsqrt %205 : vector<18x1xf32>
    %207 = vector.broadcast %206 : vector<18x1xf32> to vector<18x32xf32>
    %208 = arith.mulf %203, %207 : vector<18x32xf32>
    %209 = vector.broadcast %189 : vector<1x32xf32> to vector<18x32xf32>
    %210 = arith.mulf %208, %209 : vector<18x32xf32>
    %211 = vector.broadcast %190 : vector<1x32xf32> to vector<18x32xf32>
    %212 = arith.addf %210, %211 : vector<18x32xf32>
    %c1_83 = arith.constant 1 : index
    %c0_84 = arith.constant 0 : index
    %c0_85 = arith.constant 0 : index
    %213 = vector.load %arg10[%c1_83, %c0_84, %c0_85] : memref<2x32x64xf32, #tpu.memory_space<vmem>>, vector<1x32x64xf32>
    %214 = vector.shape_cast %213 : vector<1x32x64xf32> to vector<32x64xf32>
    %cst_86 = arith.constant dense<0.000000e+00> : vector<18x64xf32>
    %215 = tpu.matmul %212, %214, %cst_86 {dimension_numbers = #tpu.dot_dimension_numbers<[1], [0], [0], [1], [0, 0, 1, 1], [], []>} : vector<18x32xf32>, vector<32x64xf32>, vector<18x64xf32> -> vector<18x64xf32>
    %c1_87 = arith.constant 1 : index
    %c0_88 = arith.constant 0 : index
    %c0_89 = arith.constant 0 : index
    %216 = vector.load %arg11[%c1_87, %c0_88, %c0_89] : memref<2x1x64xf32, #tpu.memory_space<vmem>>, vector<1x1x64xf32>
    %217 = vector.shape_cast %216 : vector<1x1x64xf32> to vector<1x64xf32>
    %218 = vector.broadcast %217 : vector<1x64xf32> to vector<18x64xf32>
    %219 = arith.addf %215, %218 : vector<18x64xf32>
    %cst_90 = arith.constant 5.000000e-01 : f32
    %220 = vector.broadcast %cst_90 : f32 to vector<18x64xf32>
    %221 = arith.mulf %220, %219 : vector<18x64xf32>
    %cst_91 = arith.constant 0.707106769 : f32
    %222 = vector.broadcast %cst_91 : f32 to vector<18x64xf32>
    %223 = arith.mulf %219, %222 : vector<18x64xf32>
    %224 = math.erf %223 : vector<18x64xf32>
    %cst_92 = arith.constant 1.000000e+00 : f32
    %225 = vector.broadcast %cst_92 : f32 to vector<18x64xf32>
    %226 = arith.addf %225, %224 : vector<18x64xf32>
    %227 = arith.mulf %221, %226 : vector<18x64xf32>
    %c1_93 = arith.constant 1 : index
    %c0_94 = arith.constant 0 : index
    %c0_95 = arith.constant 0 : index
    %228 = vector.load %arg12[%c1_93, %c0_94, %c0_95] : memref<2x64x32xf32, #tpu.memory_space<vmem>>, vector<1x64x32xf32>
    %229 = vector.shape_cast %228 : vector<1x64x32xf32> to vector<64x32xf32>
    %cst_96 = arith.constant dense<0.000000e+00> : vector<18x32xf32>
    %230 = tpu.matmul %227, %229, %cst_96 {dimension_numbers = #tpu.dot_dimension_numbers<[1], [0], [0], [1], [0, 0, 1, 1], [], []>} : vector<18x64xf32>, vector<64x32xf32>, vector<18x32xf32> -> vector<18x32xf32>
    %c1_97 = arith.constant 1 : index
    %c0_98 = arith.constant 0 : index
    %c0_99 = arith.constant 0 : index
    %231 = vector.load %arg13[%c1_97, %c0_98, %c0_99] : memref<2x1x32xf32, #tpu.memory_space<vmem>>, vector<1x1x32xf32>
    %232 = vector.shape_cast %231 : vector<1x1x32xf32> to vector<1x32xf32>
    %233 = vector.broadcast %232 : vector<1x32xf32> to vector<18x32xf32>
    %234 = arith.addf %230, %233 : vector<18x32xf32>
    %235 = arith.addf %153, %234 : vector<18x32xf32>
    %236 = vector.extract_strided_slice %235 {offsets = [0, 0], sizes = [1, 32], strides = [1, 1]} : vector<18x32xf32> to vector<1x32xf32>
    %237 = vector.extract_strided_slice %235 {offsets = [9, 0], sizes = [1, 32], strides = [1, 1]} : vector<18x32xf32> to vector<1x32xf32>
    %238 = tpu.concatenate %236, %237 in 0 : vector<1x32xf32>, vector<1x32xf32> -> vector<2x32xf32>
    %c0_100 = arith.constant 0 : index
    %c0_101 = arith.constant 0 : index
    %239 = vector.load %arg14[%c0_100, %c0_101] : memref<2x32xf32, #tpu.memory_space<vmem>>, vector<2x32xf32>
    %240 = vector.extract_strided_slice %239 {offsets = [0, 0], sizes = [1, 32], strides = [1, 1]} : vector<2x32xf32> to vector<1x32xf32>
    %241 = vector.extract_strided_slice %239 {offsets = [1, 0], sizes = [1, 32], strides = [1, 1]} : vector<2x32xf32> to vector<1x32xf32>
    %cst_102 = arith.constant dense<0.000000e+00> : vector<2xf32>
    %242 = vector.multi_reduction <add>, %238, %cst_102 [1] : vector<2x32xf32> to vector<2xf32>
    %243 = vector.shape_cast %242 : vector<2xf32> to vector<2x1xf32>
    %cst_103 = arith.constant 3.200000e+01 : f32
    %244 = vector.broadcast %cst_103 : f32 to vector<2x1xf32>
    %245 = arith.divf %243, %244 : vector<2x1xf32>
    %246 = vector.broadcast %245 : vector<2x1xf32> to vector<2x32xf32>
    %247 = arith.subf %238, %246 : vector<2x32xf32>
    %248 = arith.mulf %247, %247 : vector<2x32xf32>
    %cst_104 = arith.constant dense<0.000000e+00> : vector<2xf32>
    %249 = vector.multi_reduction <add>, %248, %cst_104 [1] : vector<2x32xf32> to vector<2xf32>
    %250 = vector.shape_cast %249 : vector<2xf32> to vector<2x1xf32>
    %cst_105 = arith.constant 3.200000e+01 : f32
    %251 = vector.broadcast %cst_105 : f32 to vector<2x1xf32>
    %252 = arith.divf %250, %251 : vector<2x1xf32>
    %253 = vector.broadcast %245 : vector<2x1xf32> to vector<2x32xf32>
    %254 = arith.subf %238, %253 : vector<2x32xf32>
    %cst_106 = arith.constant 9.99999974E-6 : f32
    %255 = vector.broadcast %cst_106 : f32 to vector<2x1xf32>
    %256 = arith.addf %252, %255 : vector<2x1xf32>
    %257 = math.rsqrt %256 : vector<2x1xf32>
    %258 = vector.broadcast %257 : vector<2x1xf32> to vector<2x32xf32>
    %259 = arith.mulf %254, %258 : vector<2x32xf32>
    %260 = vector.broadcast %240 : vector<1x32xf32> to vector<2x32xf32>
    %261 = arith.mulf %259, %260 : vector<2x32xf32>
    %262 = vector.broadcast %241 : vector<1x32xf32> to vector<2x32xf32>
    %263 = arith.addf %261, %262 : vector<2x32xf32>
    %c0_107 = arith.constant 0 : index
    %c0_108 = arith.constant 0 : index
    %264 = vector.load %arg15[%c0_107, %c0_108] : memref<32x10xf32, #tpu.memory_space<vmem>>, vector<32x10xf32>
    %cst_109 = arith.constant dense<0.000000e+00> : vector<2x10xf32>
    %265 = tpu.matmul %263, %264, %cst_109 {dimension_numbers = #tpu.dot_dimension_numbers<[1], [0], [0], [1], [0, 0, 1, 1], [], []>} : vector<2x32xf32>, vector<32x10xf32>, vector<2x10xf32> -> vector<2x10xf32>
    %c0_110 = arith.constant 0 : index
    %c0_111 = arith.constant 0 : index
    %266 = vector.load %arg16[%c0_110, %c0_111] : memref<1x10xf32, #tpu.memory_space<vmem>>, vector<1x10xf32>
    %267 = vector.broadcast %266 : vector<1x10xf32> to vector<2x10xf32>
    %268 = arith.addf %265, %267 : vector<2x10xf32>
    %c0_112 = arith.constant 0 : index
    %c0_113 = arith.constant 0 : index
    %269 = vector.load %arg17[%c0_112, %c0_113] : memref<2x10xf32, #tpu.memory_space<vmem>>, vector<2x10xf32>
    tpu.vector_store %arg17[%c0_112, %c0_113], %268 {strides = array<i32>} : memref<2x10xf32, #tpu.memory_space<vmem>>, vector<2x10xf32>,
    return
  }
}

</mosaic_0001>

<llo_original>
// kernel: tile.15
$region0: #{tile.15}
  %s0 = inlined_call_operand.vmem [shape: s32[2,9], index: 0, kind: input, shape index: {}]
  %s1 = inlined_call_operand.vmem [shape: s32[18], index: 1, kind: output, shape index: {}]
  $region1: #{tile.15} parent=0
    #allocation0 [shape = 'u8[4096]{0}', space=vmem, size = 0x1000, scoped, tag = 'scoped mem for output reshape']
    #allocation1 [shape = 'u8[4096]{0}', space=vmem, size = 0x1000, scoped, tag = 'scoped mem for input reshape']
    %s3 = sshllo.u32 0, 2
    %v4 = vld [vmem:[%s0] sm:%s3]
    %5 = vst [vmem:[#allocation1] sm:%s3] %v4
    %v6 = vld [vmem:[#allocation1] sm:$0x1]
    %vm7 = vcmask 72704
    %8 = vst.msk [vmem:[#allocation0] sm:$0x1] %vm7, %v6
    %s9 = scalar_lea.vmem [#allocation1], 1
    %v10 = vld [vmem:[%s9] sm:$0x1]
    %11 = vrot.lane.b32.xlu0 %v10, 9
    %v12 = vpop.permute.xlu0 %11
    %vm13 = vcmask 146504
    %14 = vst.msk [vmem:[#allocation0] sm:$0x1] %vm13, %v12
    %s16 = sshllo.u32 0, 1
    %v18 = vld [vmem:[#allocation0] sm:%s16]
    %s19 = sshllo.u32 0, 1
    %20 = vst [vmem:[%s1] sm:%s19] %v18

// kernel: tile.16
$region0: #{tile.16}
  #allocation0 [shape = 's32[1]{0}', space=sflag, size = 0x4, scoped, tag = 'scoped memory for tile.16']
  %s0 = inlined_call_operand.vmem [shape: s32[18], index: 0, kind: input, shape index: {}]
  %s1 = inlined_call_operand.vmem [shape: s32[4,18], index: 1, kind: output, shape index: {}]
  // Predicated region
  $region2: #{tile.16} parent=0 // pred_check
    _
  $region3: #{tile.16} parent=0 // pred_check_branch
    %3 = sbr.rel (0) target = $region5
  $region4: #{tile.16} parent=0 // pred_region
    _
  $region5: #{tile.16} parent=0 // pred_fallthru
    _
  %v4 = vld [vmem:[%s0] ss:$0 sm:$0xff]
  %5 = vst [vmem:[%s1] sm:$0xf] %v4

// kernel: tile.13
$region0: #{tile.13}
  %s0 = inlined_call_operand.vmem [shape: f32[2,9,32], index: 0, kind: input, shape index: {}]
  %s1 = inlined_call_operand.vmem [shape: f32[18,32], index: 1, kind: output, shape index: {}]
  %v2 = vld [vmem:[%s0] sm:$0xff]
  %vm3 = vcmask 261120
  %4 = vst.msk [vmem:[%s1] sm:$0xff] %vm3, %v2
  %s5 = scalar_lea.vmem %s0, 8
  %s6 = smov 3
  %v7 = vld [vmem:[%s5] ss:$8 sm:%s6]
  %vm8 = vcmask 261120
  %s9 = scalar_lea.vmem %s1, 8
  %10 = vst.msk [vmem:[%s9] sm:$0x3] %vm8, %v7
  %s11 = scalar_lea.vmem %s0, 17
  %v12 = vld [vmem:[%s11] sm:$0xff]
  %vm13 = vcmask 261120
  %s14 = scalar_lea.vmem %s1, 10
  %15 = vst.msk [vmem:[%s14] sm:$0xff] %vm13, %v12

// kernel: vit_features_forward.1
$region0: #{vit_features_forward.1}
  #allocation0 [shape = 'u32[]', space=smem, size = 0x4, offset = 0x4, fixed_abs, tag = 'smem constant byte address 0x4 - core index']
  #allocation1 [shape = 'u32[144,128]{1,0:T(1,128)}', space=vmem, size = 0x12000, scoped, tag = 'internal scratch']
  %s0 = inlined_call_operand.vmem [shape: f32[18,32], index: 0, kind: input, shape index: {}]
  %s1 = inlined_call_operand.vmem [shape: f32[32,32], index: 1, kind: input, shape index: {}]
  %s2 = inlined_call_operand.vmem [shape: f32[18,32], index: 2, kind: input, shape index: {}]
  %s3 = inlined_call_operand.vmem [shape: s32[72,1], index: 3, kind: input, shape index: {}]
  %s4 = inlined_call_operand.vmem [shape: s32[72,1], index: 4, kind: input, shape index: {}]
  %s5 = inlined_call_operand.vmem [shape: s32[1,18], index: 5, kind: input, shape index: {}]
  %s6 = inlined_call_operand.vmem [shape: s32[1,32], index: 6, kind: input, shape index: {}]
  %s7 = inlined_call_operand.vmem [shape: f32[2,4,32], index: 7, kind: input, shape index: {}]
  %s8 = inlined_call_operand.vmem [shape: f32[2,32,96], index: 8, kind: input, shape index: {}]
  %s9 = inlined_call_operand.vmem [shape: f32[2,32,32], index: 9, kind: input, shape index: {}]
  %s10 = inlined_call_operand.vmem [shape: f32[2,32,64], index: 10, kind: input, shape index: {}]
  %s11 = inlined_call_operand.vmem [shape: f32[2,1,64], index: 11, kind: input, shape index: {}]
  %s12 = inlined_call_operand.vmem [shape: f32[2,64,32], index: 12, kind: input, shape index: {}]
  %s13 = inlined_call_operand.vmem [shape: f32[2,1,32], index: 13, kind: input, shape index: {}]
  %s14 = inlined_call_operand.vmem [shape: f32[2,32], index: 14, kind: input, shape index: {}]
  %s15 = inlined_call_operand.vmem [shape: f32[32,10], index: 15, kind: input, shape index: {}]
  %s16 = inlined_call_operand.vmem [shape: f32[1,10], index: 16, kind: input, shape index: {}]
  %s17 = inlined_call_operand.hbm [shape: f32[2,10], index: 17, kind: output, shape index: {}]
  %s18 = sld [smem:[#allocation0]]
  $region78: #{vit_features_forward.1} parent=0
    _
  %s20 = ssub.s32 1, %s18
  %s21 = scalar_select 0, %s20, %s18
  $region1: #{vit_features_forward.1} parent=0
    #allocation2 [shape = 'u8[1024]{0}', space=vmem, size = 0x400, scoped, tag = 'output window, operand 0, single buffered']
    #allocation3 [shape = 's32[1]{0}', space=sflag, size = 0x4, scoped, tag = 'scoped memory for vit_features_forward.1']
    %22 = vsyncpa [#allocation3], 0
    // Predicated region
    $region2: #{vit_features_forward.1} parent=1 // pred_check
      _
    $region3: #{vit_features_forward.1} parent=1 // pred_check_branch
      %24 = sbr.rel (0) target = $region5
    $region4: #{vit_features_forward.1} parent=1 // pred_region
      _
    $region5: #{vit_features_forward.1} parent=1 // pred_fallthru
      _
    // Predicated region
    $region6: #{vit_features_forward.1} parent=1 // pred_check
      _
    $region7: #{vit_features_forward.1} parent=1 // pred_check_branch
      %26 = sbr.rel (0) target = $region9
    $region8: #{vit_features_forward.1} parent=1 // pred_region
      _
    $region9: #{vit_features_forward.1} parent=1 // pred_fallthru
      _
    // Predicated region
    $region10: #{vit_features_forward.1} parent=1 // pred_check
      _
    $region11: #{vit_features_forward.1} parent=1 // pred_check_branch
      %28 = sbr.rel (0) target = $region13
    $region12: #{vit_features_forward.1} parent=1 // pred_region
      _
    $region13: #{vit_features_forward.1} parent=1 // pred_fallthru
      _
    // Predicated region
    $region14: #{vit_features_forward.1} parent=1 // pred_check
      _
    $region15: #{vit_features_forward.1} parent=1 // pred_check_branch
      %30 = sbr.rel (0) target = $region17
    $region16: #{vit_features_forward.1} parent=1 // pred_region
      _
    $region17: #{vit_features_forward.1} parent=1 // pred_fallthru
      _
    // Predicated region
    $region18: #{vit_features_forward.1} parent=1 // pred_check
      _
    $region19: #{vit_features_forward.1} parent=1 // pred_check_branch
      %32 = sbr.rel (0) target = $region21
    $region20: #{vit_features_forward.1} parent=1 // pred_region
      _
    $region21: #{vit_features_forward.1} parent=1 // pred_fallthru
      _
    // Predicated region
    $region22: #{vit_features_forward.1} parent=1 // pred_check
      _
    $region23: #{vit_features_forward.1} parent=1 // pred_check_branch
      %34 = sbr.rel (0) target = $region25
    $region24: #{vit_features_forward.1} parent=1 // pred_region
      _
    $region25: #{vit_features_forward.1} parent=1 // pred_fallthru
      _
    // Predicated region
    $region26: #{vit_features_forward.1} parent=1 // pred_check
      _
    $region27: #{vit_features_forward.1} parent=1 // pred_check_branch
      %36 = sbr.rel (0) target = $region29
    $region28: #{vit_features_forward.1} parent=1 // pred_region
      _
    $region29: #{vit_features_forward.1} parent=1 // pred_fallthru
      _
    // Predicated region
    $region30: #{vit_features_forward.1} parent=1 // pred_check
      _
    $region31: #{vit_features_forward.1} parent=1 // pred_check_branch
      %38 = sbr.rel (0) target = $region33
    $region32: #{vit_features_forward.1} parent=1 // pred_region
      _
    $region33: #{vit_features_forward.1} parent=1 // pred_fallthru
      _
    // Predicated region
    $region34: #{vit_features_forward.1} parent=1 // pred_check
      _
    $region35: #{vit_features_forward.1} parent=1 // pred_check_branch
      %40 = sbr.rel (0) target = $region37
    $region36: #{vit_features_forward.1} parent=1 // pred_region
      _
    $region37: #{vit_features_forward.1} parent=1 // pred_fallthru
      _
    // Predicated region
    $region38: #{vit_features_forward.1} parent=1 // pred_check
      _
    $region39: #{vit_features_forward.1} parent=1 // pred_check_branch
      %42 = sbr.rel (0) target = $region41
    $region40: #{vit_features_forward.1} parent=1 // pred_region
      _
    $region41: #{vit_features_forward.1} parent=1 // pred_fallthru
      _
    // Predicated region
    $region42: #{vit_features_forward.1} parent=1 // pred_check
      _
    $region43: #{vit_features_forward.1} parent=1 // pred_check_branch
      %44 = sbr.rel (0) target = $region45
    $region44: #{vit_features_forward.1} parent=1 // pred_region
      _
    $region45: #{vit_features_forward.1} parent=1 // pred_fallthru
      _
    // Predicated region
    $region46: #{vit_features_forward.1} parent=1 // pred_check
      _
    $region47: #{vit_features_forward.1} parent=1 // pred_check_branch
      %46 = sbr.rel (0) target = $region49
    $region48: #{vit_features_forward.1} parent=1 // pred_region
      _
    $region49: #{vit_features_forward.1} parent=1 // pred_fallthru
      _
    // Predicated region
    $region50: #{vit_features_forward.1} parent=1 // pred_check
      _
    $region51: #{vit_features_forward.1} parent=1 // pred_check_branch
      %48 = sbr.rel (0) target = $region53
    $region52: #{vit_features_forward.1} parent=1 // pred_region
      _
    $region53: #{vit_features_forward.1} parent=1 // pred_fallthru
      _
    // Predicated region
    $region54: #{vit_features_forward.1} parent=1 // pred_check
      _
    $region55: #{vit_features_forward.1} parent=1 // pred_check_branch
      %50 = sbr.rel (0) target = $region57
    $region56: #{vit_features_forward.1} parent=1 // pred_region
      _
    $region57: #{vit_features_forward.1} parent=1 // pred_fallthru
      _
    // Predicated region
    $region58: #{vit_features_forward.1} parent=1 // pred_check
      _
    $region59: #{vit_features_forward.1} parent=1 // pred_check_branch
      %52 = sbr.rel (0) target = $region61
    $region60: #{vit_features_forward.1} parent=1 // pred_region
      _
    $region61: #{vit_features_forward.1} parent=1 // pred_fallthru
      _
    // Predicated region
    $region62: #{vit_features_forward.1} parent=1 // pred_check
      _
    $region63: #{vit_features_forward.1} parent=1 // pred_check_branch
      %54 = sbr.rel (0) target = $region65
    $region64: #{vit_features_forward.1} parent=1 // pred_region
      _
    $region65: #{vit_features_forward.1} parent=1 // pred_fallthru
      _
    // Predicated region
    $region66: #{vit_features_forward.1} parent=1 // pred_check
      _
    $region67: #{vit_features_forward.1} parent=1 // pred_check_branch
      %56 = sbr.rel (0) target = $region69
    $region68: #{vit_features_forward.1} parent=1 // pred_region
      _
    $region69: #{vit_features_forward.1} parent=1 // pred_fallthru
      _
    %v57 = vld [vmem:[%s0] sm:$0xff]
    %v58 = vld [vmem:[%s0 + $0x8] sm:$0xff]
    %v59 = vld [vmem:[%s0 + $0x10] sm:$0x3]
    %v60 = vld [vmem:[%s1] sm:$0xff]
    %v61 = vld [vmem:[%s1 + $0x8] sm:$0xff]
    %v62 = vld [vmem:[%s1 + $0x10] sm:$0xff]
    %v63 = vld [vmem:[%s1 + $0x18] sm:$0xff]
    %v64 = vld [vmem:[%s2] sm:$0xff]
    %v65 = vld [vmem:[%s2 + $0x8] sm:$0xff]
    %v66 = vld [vmem:[%s2 + $0x10] sm:$0x3]
    %vm67 = vcmask 261120
    %v69 = vsel %vm67, %v57, 0
    %v72 = vsel %vm67, %v58, 0
    %v75 = vsel %vm67, %v59, 0
    %77 = vmatprep.subr.mxu0 0.0
    %78 = vmatpush1.msra.mxu0 %v60
    %79 = vmatprep.subr.mxu0 0.0
    %80 = vmatpush1.msra.mxu0 %v61
    %81 = vmatprep.subr.mxu0 0.0
    %82 = vmatpush1.msra.mxu0 %v62
    %83 = vmatprep.subr.mxu0 0.0
    %84 = vmatpush1.msra.mxu0 %v63
    %85 = vmatprep.subr.mxu0 0.0
    %86 = vmatpush1.msra.mxu0 0.0
    %87 = vmatprep.subr.mxu0 0.0
    %88 = vmatpush1.msra.mxu0 0.0
    %89 = vmatprep.subr.mxu0 0.0
    %90 = vmatpush1.msra.mxu0 0.0
    %91 = vmatprep.subr.mxu0 0.0
    %92 = vmatpush1.msra.mxu0 0.0
    %93 = vmatprep.subr.mxu0 0.0
    %94 = vmatpush1.msra.mxu0 0.0
    %95 = vmatprep.subr.mxu0 0.0
    %96 = vmatpush1.msra.mxu0 0.0
    %97 = vmatprep.subr.mxu0 0.0
    %98 = vmatpush1.msra.mxu0 0.0
    %99 = vmatprep.subr.mxu0 0.0
    %100 = vmatpush1.msra.mxu0 0.0
    %101 = vmatprep.subr.mxu0 0.0
    %102 = vmatpush1.msra.mxu0 0.0
    %103 = vmatprep.subr.mxu0 0.0
    %104 = vmatpush1.msra.mxu0 0.0
    %105 = vmatprep.subr.mxu0 0.0
    %106 = vmatpush1.msra.mxu0 0.0
    %107 = vmatprep.subr.mxu0 0.0
    %108 = vmatpush1.msra.mxu0 0.0
    %109 = vmatprep.subr.mxu0 0.0
    %110 = vmatpush1.msra.mxu0 0.0
    %111 = vmatprep.subr.mxu0 0.0
    %112 = vmatpush1.msra.mxu0 0.0
    %113 = vmatprep.subr.mxu0 0.0
    %114 = vmatpush1.msra.mxu0 0.0
    %115 = vmatprep.subr.mxu0 0.0
    %116 = vmatpush1.msra.mxu0 0.0
    %117 = vmatprep.subr.mxu0 0.0
    %118 = vmatpush1.msra.mxu0 0.0
    %119 = vmatprep.subr.mxu0 0.0
    %120 = vmatpush1.msra.mxu0 0.0
    %121 = vmatprep.subr.mxu0 0.0
    %122 = vmatpush1.msra.mxu0 0.0
    %123 = vmatprep.subr.mxu0 0.0
    %124 = vmatpush1.msra.mxu0 0.0
    %125 = vmatprep.subr.mxu0 0.0
    %126 = vmatpush1.msra.mxu0 0.0
    %127 = vmatprep.subr.mxu0 0.0
    %128 = vmatpush1.msra.mxu0 0.0
    %129 = vmatprep.subr.mxu0 0.0
    %130 = vmatpush1.msra.mxu0 0.0
    %131 = vmatprep.subr.mxu0 0.0
    %132 = vmatpush1.msra.mxu0 0.0
    %133 = vmatprep.subr.mxu0 0.0
    %134 = vmatpush1.msra.mxu0 0.0
    %135 = vmatprep.subr.mxu0 0.0
    %136 = vmatpush1.msra.mxu0 0.0
    %137 = vmatprep.subr.mxu0 0.0
    %138 = vmatpush1.msra.mxu0 0.0
    %139 = vmatprep.subr.mxu0 0.0
    %140 = vmatpush1.msra.mxu0 0.0
    %141 = vmatprep.mubr.f32.mxu0 0.0
    %142 = vmatmul.mubr.f32.gmra.mrb[0].mxu0 %v69
    %v143 = vpop.f32.mrb[0].mxu0
    %v144 = vadd.f32 %v64, %v143
    %v145 = vpop.f32.mrb[0].mxu0
    %146 = vmatprep.mubr.f32.mxu0 0.0
    %147 = vmatmul.mubr.f32.gmra.mrb[0].mxu0 %v72
    %v148 = vpop.f32.mrb[0].mxu0
    %v149 = vadd.f32 %v65, %v148
    %v150 = vpop.f32.mrb[0].mxu0
    %151 = vmatprep.mubr.f32.mxu0 0.0
    %152 = vmatmul.mubr.f32.gmra.mrb[0].mxu0 %v75
    %v153 = vpop.f32.mrb[0].mxu0
    %v154 = vadd.f32 %v66, %v153
    %v155 = vpop.f32.mrb[0].mxu0
    %156 = vdwg.mxu0
    %v157 = vld [vmem:[%s3] sm:$0xff]
    %v158 = vld [vmem:[%s3 + $0x8] sm:$0xff]
    %v159 = vld [vmem:[%s3 + $0x10] sm:$0xff]
    %v160 = vld [vmem:[%s3 + $0x18] sm:$0xff]
    %v161 = vld [vmem:[%s3 + $0x20] sm:$0xff]
    %v162 = vld [vmem:[%s3 + $0x28] sm:$0xff]
    %v163 = vld [vmem:[%s3 + $0x30] sm:$0xff]
    %v164 = vld [vmem:[%s3 + $0x38] sm:$0xff]
    %v165 = vld [vmem:[%s3 + $0x40] sm:$0xff]
    %v166 = vld [vmem:[%s5] sm:$0x1]
    %167 = vset.pattern.permute.xlu0 0
    %168 = vperm.xlu0 %167, %v157
    %v169 = vpop.permute.xlu0 %168
    %170 = vset.pattern.permute.xlu0 0
    %171 = vperm.xlu0 %170, %v158
    %v172 = vpop.permute.xlu0 %171
    %173 = vset.pattern.permute.xlu0 0
    %174 = vperm.xlu0 %173, %v159
    %v175 = vpop.permute.xlu0 %174
    %176 = vset.pattern.permute.xlu0 0
    %177 = vperm.xlu0 %176, %v160
    %v178 = vpop.permute.xlu0 %177
    %179 = vset.pattern.permute.xlu0 0
    %180 = vperm.xlu0 %179, %v161
    %v181 = vpop.permute.xlu0 %180
    %182 = vset.pattern.permute.xlu0 0
    %183 = vperm.xlu0 %182, %v162
    %v184 = vpop.permute.xlu0 %183
    %185 = vset.pattern.permute.xlu0 0
    %186 = vperm.xlu0 %185, %v163
    %v187 = vpop.permute.xlu0 %186
    %188 = vset.pattern.permute.xlu0 0
    %189 = vperm.xlu0 %188, %v164
    %v190 = vpop.permute.xlu0 %189
    %191 = vset.pattern.permute.xlu0 0
    %192 = vperm.xlu0 %191, %v165
    %v193 = vpop.permute.xlu0 %192
    %v194 = vlaneseq
    %v195 = vshrl.u32 %v194, 7
    %v196 = vsub.s32 0, %v195
    %v197 = vrot.slane %v166, %v196
    %vm198 = vcmp.eq.s32.totalorder %v169, %v197
    %vm199 = vcmp.eq.s32.totalorder %v172, %v197
    %vm200 = vcmp.eq.s32.totalorder %v175, %v197
    %vm201 = vcmp.eq.s32.totalorder %v178, %v197
    %vm202 = vcmp.eq.s32.totalorder %v181, %v197
    %vm203 = vcmp.eq.s32.totalorder %v184, %v197
    %vm204 = vcmp.eq.s32.totalorder %v187, %v197
    %vm205 = vcmp.eq.s32.totalorder %v190, %v197
    %vm206 = vcmp.eq.s32.totalorder %v193, %v197
    %v207 = vsel %vm198, 0.0, -1e+30
    %v208 = vsel %vm199, 0.0, -1e+30
    %v209 = vsel %vm200, 0.0, -1e+30
    %v210 = vsel %vm201, 0.0, -1e+30
    %v211 = vsel %vm202, 0.0, -1e+30
    %v212 = vsel %vm203, 0.0, -1e+30
    %v213 = vsel %vm204, 0.0, -1e+30
    %v214 = vsel %vm205, 0.0, -1e+30
    %v215 = vsel %vm206, 0.0, -1e+30
    %v216 = vld [vmem:[%s4] sm:$0xff]
    %v217 = vld [vmem:[%s4 + $0x8] sm:$0xff]
    %v218 = vld [vmem:[%s4 + $0x10] sm:$0xff]
    %v219 = vld [vmem:[%s4 + $0x18] sm:$0xff]
    %v220 = vld [vmem:[%s4 + $0x20] sm:$0xff]
    %v221 = vld [vmem:[%s4 + $0x28] sm:$0xff]
    %v222 = vld [vmem:[%s4 + $0x30] sm:$0xff]
    %v223 = vld [vmem:[%s4 + $0x38] sm:$0xff]
    %v224 = vld [vmem:[%s4 + $0x40] sm:$0xff]
    %v225 = vld [vmem:[%s6] sm:$0x1]
    %226 = vset.pattern.permute.xlu0 0
    %227 = vperm.xlu0 %226, %v216
    %v228 = vpop.permute.xlu0 %227
    %229 = vset.pattern.permute.xlu0 0
    %230 = vperm.xlu0 %229, %v217
    %v231 = vpop.permute.xlu0 %230
    %232 = vset.pattern.permute.xlu0 0
    %233 = vperm.xlu0 %232, %v218
    %v234 = vpop.permute.xlu0 %233
    %235 = vset.pattern.permute.xlu0 0
    %236 = vperm.xlu0 %235, %v219
    %v237 = vpop.permute.xlu0 %236
    %238 = vset.pattern.permute.xlu0 0
    %239 = vperm.xlu0 %238, %v220
    %v240 = vpop.permute.xlu0 %239
    %241 = vset.pattern.permute.xlu0 0
    %242 = vperm.xlu0 %241, %v221
    %v243 = vpop.permute.xlu0 %242
    %244 = vset.pattern.permute.xlu0 0
    %245 = vperm.xlu0 %244, %v222
    %v246 = vpop.permute.xlu0 %245
    %247 = vset.pattern.permute.xlu0 0
    %248 = vperm.xlu0 %247, %v223
    %v249 = vpop.permute.xlu0 %248
    %250 = vset.pattern.permute.xlu0 0
    %251 = vperm.xlu0 %250, %v224
    %v252 = vpop.permute.xlu0 %251
    %v253 = vlaneseq
    %v254 = vshrl.u32 %v253, 7
    %v255 = vsub.s32 0, %v254
    %v256 = vrot.slane %v225, %v255
    %vm257 = vcmp.eq.s32.totalorder %v228, %v256
    %vm258 = vcmp.eq.s32.totalorder %v231, %v256
    %vm259 = vcmp.eq.s32.totalorder %v234, %v256
    %vm260 = vcmp.eq.s32.totalorder %v237, %v256
    %vm261 = vcmp.eq.s32.totalorder %v240, %v256
    %vm262 = vcmp.eq.s32.totalorder %v243, %v256
    %vm263 = vcmp.eq.s32.totalorder %v246, %v256
    %vm264 = vcmp.eq.s32.totalorder %v249, %v256
    %vm265 = vcmp.eq.s32.totalorder %v252, %v256
    %v266 = vsel %vm257, 1, 0
    %v267 = vsel %vm258, 1, 0
    %v268 = vsel %vm259, 1, 0
    %v269 = vsel %vm260, 1, 0
    %v270 = vsel %vm261, 1, 0
    %v271 = vsel %vm262, 1, 0
    %v272 = vsel %vm263, 1, 0
    %v273 = vsel %vm264, 1, 0
    %v274 = vsel %vm265, 1, 0
    %v275 = vcvt.s32.f32 %v266
    %v276 = vcvt.s32.f32 %v267
    %v277 = vcvt.s32.f32 %v268
    %v278 = vcvt.s32.f32 %v269
    %v279 = vcvt.s32.f32 %v270
    %v280 = vcvt.s32.f32 %v271
    %v281 = vcvt.s32.f32 %v272
    %v282 = vcvt.s32.f32 %v273
    %v283 = vcvt.s32.f32 %v274
    %v284 = vld [vmem:[%s7] sm:$0xf]
    %v285 = vsel %vm67, %v144, 0.0
    %286 = vadd.xlane.f32.xlu0 %v285
    %v287 = vpop.xlane.xlu0 %286
    %v288 = vsel %vm67, %v149, 0.0
    %289 = vadd.xlane.f32.xlu0 %v288
    %v290 = vpop.xlane.xlu0 %289
    %vm291 = vcmask 254976
    %v292 = vsel %vm291, %v154, 0.0
    %293 = vadd.xlane.f32.xlu0 %v292
    %v294 = vpop.xlane.xlu0 %293
    %v295 = vrcp.pop 32.0
    %v296 = vmul.f32 %v287, %v295
    %v297 = vmul.f32 %v290, %v295
    %v298 = vmul.f32 %v294, %v295
    %v299 = vsub.f32 %v144, %v296
    %v300 = vsub.f32 %v149, %v297
    %v301 = vsub.f32 %v154, %v298
    %v302 = vmul.f32 %v299, %v299
    %v303 = vmul.f32 %v300, %v300
    %v304 = vmul.f32 %v301, %v301
    %v305 = vsel %vm67, %v302, 0.0
    %306 = vadd.xlane.f32.xlu0 %v305
    %v307 = vpop.xlane.xlu0 %306
    %v308 = vsel %vm67, %v303, 0.0
    %309 = vadd.xlane.f32.xlu0 %v308
    %v310 = vpop.xlane.xlu0 %309
    %v311 = vsel %vm291, %v304, 0.0
    %312 = vadd.xlane.f32.xlu0 %v311
    %v313 = vpop.xlane.xlu0 %312
    %v314 = vmul.f32 %v307, %v295
    %v315 = vmul.f32 %v310, %v295
    %v316 = vmul.f32 %v313, %v295
    %v317 = vadd.f32 %v314, 1e-05
    %v318 = vadd.f32 %v315, 1e-05
    %v319 = vadd.f32 %v316, 1e-05
    %v320 = vrsqrt.pop %v317
    %v321 = vrsqrt.pop %v318
    %v322 = vrsqrt.pop %v319
    %v323 = vmul.f32 %v299, %v320
    %v324 = vmul.f32 %v300, %v321
    %v325 = vmul.f32 %v301, %v322
    %v326 = vlaneseq
    %v327 = vshrl.u32 %v326, 7
    %v328 = vsub.s32 0, %v327
    %v329 = vrot.slane %v284, %v328
    %v330 = vmul.f32 %v323, %v329
    %v331 = vmul.f32 %v324, %v329
    %v332 = vmul.f32 %v325, %v329
    %v333 = vlaneseq
    %v334 = vshrl.u32 %v333, 7
    %v335 = vsub.s32 1, %v334
    %v336 = vrot.slane %v284, %v335
    %v337 = vadd.f32 %v330, %v336
    %v338 = vadd.f32 %v331, %v336
    %v339 = vadd.f32 %v332, %v336
    %v340 = vld [vmem:[%s8] sm:$0xff]
    %v341 = vld [vmem:[%s8 + $0x8] sm:$0xff]
    %v342 = vld [vmem:[%s8 + $0x10] sm:$0xff]
    %v343 = vld [vmem:[%s8 + $0x18] sm:$0xff]
    %v345 = vsel %vm67, %v337, 0
    %v348 = vsel %vm67, %v338, 0
    %v351 = vsel %vm67, %v339, 0
    %353 = vmatprep.subr.mxu0 0.0
    %354 = vmatpush1.msra.mxu0 %v340
    %355 = vmatprep.subr.mxu0 0.0
    %356 = vmatpush1.msra.mxu0 %v341
    %357 = vmatprep.subr.mxu0 0.0
    %358 = vmatpush1.msra.mxu0 %v342
    %359 = vmatprep.subr.mxu0 0.0
    %360 = vmatpush1.msra.mxu0 %v343
    %361 = vmatprep.subr.mxu0 0.0
    %362 = vmatpush1.msra.mxu0 0.0
    %363 = vmatprep.subr.mxu0 0.0
    %364 = vmatpush1.msra.mxu0 0.0
    %365 = vmatprep.subr.mxu0 0.0
    %366 = vmatpush1.msra.mxu0 0.0
    %367 = vmatprep.subr.mxu0 0.0
    %368 = vmatpush1.msra.mxu0 0.0
    %369 = vmatprep.subr.mxu0 0.0
    %370 = vmatpush1.msra.mxu0 0.0
    %371 = vmatprep.subr.mxu0 0.0
    %372 = vmatpush1.msra.mxu0 0.0
    %373 = vmatprep.subr.mxu0 0.0
    %374 = vmatpush1.msra.mxu0 0.0
    %375 = vmatprep.subr.mxu0 0.0
    %376 = vmatpush1.msra.mxu0 0.0
    %377 = vmatprep.subr.mxu0 0.0
    %378 = vmatpush1.msra.mxu0 0.0
    %379 = vmatprep.subr.mxu0 0.0
    %380 = vmatpush1.msra.mxu0 0.0
    %381 = vmatprep.subr.mxu0 0.0
    %382 = vmatpush1.msra.mxu0 0.0
    %383 = vmatprep.subr.mxu0 0.0
    %384 = vmatpush1.msra.mxu0 0.0
    %385 = vmatprep.subr.mxu0 0.0
    %386 = vmatpush1.msra.mxu0 0.0
    %387 = vmatprep.subr.mxu0 0.0
    %388 = vmatpush1.msra.mxu0 0.0
    %389 = vmatprep.subr.mxu0 0.0
    %390 = vmatpush1.msra.mxu0 0.0
    %391 = vmatprep.subr.mxu0 0.0
    %392 = vmatpush1.msra.mxu0 0.0
    %393 = vmatprep.subr.mxu0 0.0
    %394 = vmatpush1.msra.mxu0 0.0
    %395 = vmatprep.subr.mxu0 0.0
    %396 = vmatpush1.msra.mxu0 0.0
    %397 = vmatprep.subr.mxu0 0.0
    %398 = vmatpush1.msra.mxu0 0.0
    %399 = vmatprep.subr.mxu0 0.0
    %400 = vmatpush1.msra.mxu0 0.0
    %401 = vmatprep.subr.mxu0 0.0
    %402 = vmatpush1.msra.mxu0 0.0
    %403 = vmatprep.subr.mxu0 0.0
    %404 = vmatpush1.msra.mxu0 0.0
    %405 = vmatprep.subr.mxu0 0.0
    %406 = vmatpush1.msra.mxu0 0.0
    %407 = vmatprep.subr.mxu0 0.0
    %408 = vmatpush1.msra.mxu0 0.0
    %409 = vmatprep.subr.mxu0 0.0
    %410 = vmatpush1.msra.mxu0 0.0
    %411 = vmatprep.subr.mxu0 0.0
    %412 = vmatpush1.msra.mxu0 0.0
    %413 = vmatprep.subr.mxu0 0.0
    %414 = vmatpush1.msra.mxu0 0.0
    %415 = vmatprep.subr.mxu0 0.0
    %416 = vmatpush1.msra.mxu0 0.0
    %417 = vmatprep.mubr.f32.mxu0 0.0
    %418 = vmatmul.mubr.f32.gmra.mrb[0].mxu0 %v345
    %v419 = vpop.f32.mrb[0].mxu0
    %v420 = vadd.f32 0.0, %v419
    %v421 = vpop.f32.mrb[0].mxu0
    %422 = vmatprep.mubr.f32.mxu0 0.0
    %423 = vmatmul.mubr.f32.gmra.mrb[0].mxu0 %v348
    %v424 = vpop.f32.mrb[0].mxu0
    %v425 = vadd.f32 0.0, %v424
    %v426 = vpop.f32.mrb[0].mxu0
    %427 = vmatprep.mubr.f32.mxu0 0.0
    %428 = vmatmul.mubr.f32.gmra.mrb[0].mxu0 %v351
    %v429 = vpop.f32.mrb[0].mxu0
    %v430 = vadd.f32 0.0, %v429
    %v431 = vpop.f32.mrb[0].mxu0
    %432 = vdwg.mxu0
    %vm436 = vcmask 1041408
    %v437 = vrot.slane %v420, 6
    %v438 = vrot.slane %v425, 6
    %v439 = vsel %vm436, %v437, %v438
    %v440 = vrot.slane %v430, 6
    %v441 = vsel %vm436, %v438, %v440
    %vm445 = vcmask 1043456
    %v446 = vrot.slane %v420, 4
    %v447 = vrot.slane %v425, 4
    %v448 = vsel %vm445, %v446, %v447
    %v449 = vrot.slane %v430, 4
    %v450 = vsel %vm445, %v447, %v449
    %vm454 = vcmask 1045504
    %v455 = vrot.slane %v420, 2
    %v456 = vrot.slane %v425, 2
    %v457 = vsel %vm454, %v455, %v456
    %v458 = vrot.slane %v430, 2
    %v459 = vsel %vm454, %v456, %v458
    %v463 = vsel %vm436, %v430, %v437
    %v464 = vsel %vm445, %v441, %v446
    %v465 = vsel %vm454, %v450, %v455
    %v466 = vmul.f32 %v420, %v275
    %v467 = vmul.f32 %v425, %v276
    %v468 = vmul.f32 %v463, %v277
    %v469 = vmul.f32 %v439, %v278
    %v470 = vmul.f32 %v464, %v279
    %v471 = vmul.f32 %v448, %v280
    %v472 = vmul.f32 %v465, %v281
    %v473 = vmul.f32 %v457, %v282
    %v474 = vmul.f32 %v459, %v283
    %475 = vrot.lane.b32.xlu0 %v420, 96
    %v476 = vpop.permute.xlu0 %475
    %477 = vrot.lane.b32.xlu0 %v425, 96
    %v478 = vpop.permute.xlu0 %477
    %479 = vrot.lane.b32.xlu0 %v430, 96
    %v480 = vpop.permute.xlu0 %479
    %v482 = vsel %vm67, %v466, 0
    %v485 = vsel %vm67, %v467, 0
    %v488 = vsel %vm67, %v468, 0
    %v491 = vsel %vm67, %v469, 0
    %v494 = vsel %vm67, %v470, 0
    %v497 = vsel %vm67, %v471, 0
    %v500 = vsel %vm67, %v472, 0
    %v503 = vsel %vm67, %v473, 0
    %v506 = vsel %vm67, %v474, 0
    %v508 = vsel %vm67, %v476, 0
    %v510 = vsel %vm67, %v478, 0
    %v512 = vsel %vm67, %v480, 0
    %514 = vmatprep.subr.mxu0 0.0
    %515 = vmatpush1.xpose.msra.mxu0 %v508
    %516 = vmatprep.subr.mxu0 0.0
    %517 = vmatpush1.xpose.msra.mxu0 %v510
    %518 = vmatprep.subr.mxu0 0.0
    %519 = vmatpush1.xpose.msra.mxu0 %v512
    %520 = vmatprep.subr.mxu0 0.0
    %521 = vmatpush1.xpose.msra.mxu0 0.0
    %522 = vmatprep.subr.mxu0 0.0
    %523 = vmatpush1.xpose.msra.mxu0 0.0
    %524 = vmatprep.subr.mxu0 0.0
    %525 = vmatpush1.xpose.msra.mxu0 0.0
    %526 = vmatprep.subr.mxu0 0.0
    %527 = vmatpush1.xpose.msra.mxu0 0.0
    %528 = vmatprep.subr.mxu0 0.0
    %529 = vmatpush1.xpose.msra.mxu0 0.0
    %530 = vmatprep.subr.mxu0 0.0
    %531 = vmatpush1.xpose.msra.mxu0 0.0
    %532 = vmatprep.subr.mxu0 0.0
    %533 = vmatpush1.xpose.msra.mxu0 0.0
    %534 = vmatprep.subr.mxu0 0.0
    %535 = vmatpush1.xpose.msra.mxu0 0.0
    %536 = vmatprep.subr.mxu0 0.0
    %537 = vmatpush1.xpose.msra.mxu0 0.0
    %538 = vmatprep.subr.mxu0 0.0
    %539 = vmatpush1.xpose.msra.mxu0 0.0
    %540 = vmatprep.subr.mxu0 0.0
    %541 = vmatpush1.xpose.msra.mxu0 0.0
    %542 = vmatprep.subr.mxu0 0.0
    %543 = vmatpush1.xpose.msra.mxu0 0.0
    %544 = vmatprep.subr.mxu0 0.0
    %545 = vmatpush1.xpose.msra.mxu0 0.0
    %546 = vmatprep.subr.mxu0 0.0
    %547 = vmatpush1.xpose.msra.mxu0 0.0
    %548 = vmatprep.subr.mxu0 0.0
    %549 = vmatpush1.xpose.msra.mxu0 0.0
    %550 = vmatprep.subr.mxu0 0.0
    %551 = vmatpush1.xpose.msra.mxu0 0.0
    %552 = vmatprep.subr.mxu0 0.0
    %553 = vmatpush1.xpose.msra.mxu0 0.0
    %554 = vmatprep.subr.mxu0 0.0
    %555 = vmatpush1.xpose.msra.mxu0 0.0
    %556 = vmatprep.subr.mxu0 0.0
    %557 = vmatpush1.xpose.msra.mxu0 0.0
    %558 = vmatprep.subr.mxu0 0.0
    %559 = vmatpush1.xpose.msra.mxu0 0.0
    %560 = vmatprep.subr.mxu0 0.0
    %561 = vmatpush1.xpose.msra.mxu0 0.0
    %562 = vmatprep.subr.mxu0 0.0
    %563 = vmatpush1.xpose.msra.mxu0 0.0
    %564 = vmatprep.subr.mxu0 0.0
    %565 = vmatpush1.xpose.msra.mxu0 0.0
    %566 = vmatprep.subr.mxu0 0.0
    %567 = vmatpush1.xpose.msra.mxu0 0.0
    %568 = vmatprep.subr.mxu0 0.0
    %569 = vmatpush1.xpose.msra.mxu0 0.0
    %570 = vmatprep.subr.mxu0 0.0
    %571 = vmatpush1.xpose.msra.mxu0 0.0
    %572 = vmatprep.subr.mxu0 0.0
    %573 = vmatpush1.xpose.msra.mxu0 0.0
    %574 = vmatprep.subr.mxu0 0.0
    %575 = vmatpush1.xpose.msra.mxu0 0.0
    %576 = vmatprep.subr.mxu0 0.0
    %577 = vmatpush1.xpose.msra.mxu0 0.0
    %578 = vmatprep.mubr.f32.mxu0 0.0
    %579 = vmatmul.mubr.f32.gmra.mrb[0].mxu0 %v482
    %v580 = vpop.f32.mrb[0].mxu0
    %v581 = vadd.f32 0.0, %v580
    %v582 = vpop.f32.mrb[0].mxu0
    %583 = vmatprep.mubr.f32.mxu0 0.0
    %584 = vmatmul.mubr.f32.gmra.mrb[0].mxu0 %v485
    %v585 = vpop.f32.mrb[0].mxu0
    %v586 = vadd.f32 0.0, %v585
    %v587 = vpop.f32.mrb[0].mxu0
    %588 = vmatprep.mubr.f32.mxu0 0.0
    %589 = vmatmul.mubr.f32.gmra.mrb[0].mxu0 %v488
    %v590 = vpop.f32.mrb[0].mxu0
    %v591 = vadd.f32 0.0, %v590
    %v592 = vpop.f32.mrb[0].mxu0
    %593 = vmatprep.mubr.f32.mxu0 0.0
    %594 = vmatmul.mubr.f32.gmra.mrb[0].mxu0 %v491
    %v595 = vpop.f32.mrb[0].mxu0
    %v596 = vadd.f32 0.0, %v595
    %v597 = vpop.f32.mrb[0].mxu0
    %598 = vmatprep.mubr.f32.mxu0 0.0
    %599 = vmatmul.mubr.f32.gmra.mrb[0].mxu0 %v494
    %v600 = vpop.f32.mrb[0].mxu0
    %v601 = vadd.f32 0.0, %v600
    %v602 = vpop.f32.mrb[0].mxu0
    %603 = vmatprep.mubr.f32.mxu0 0.0
    %604 = vmatmul.mubr.f32.gmra.mrb[0].mxu0 %v497
    %v605 = vpop.f32.mrb[0].mxu0
    %v606 = vadd.f32 0.0, %v605
    %v607 = vpop.f32.mrb[0].mxu0
    %608 = vmatprep.mubr.f32.mxu0 0.0
    %609 = vmatmul.mubr.f32.gmra.mrb[0].mxu0 %v500
    %v610 = vpop.f32.mrb[0].mxu0
    %v611 = vadd.f32 0.0, %v610
    %v612 = vpop.f32.mrb[0].mxu0
    %613 = vmatprep.mubr.f32.mxu0 0.0
    %614 = vmatmul.mubr.f32.gmra.mrb[0].mxu0 %v503
    %v615 = vpop.f32.mrb[0].mxu0
    %v616 = vadd.f32 0.0, %v615
    %v617 = vpop.f32.mrb[0].mxu0
    %618 = vmatprep.mubr.f32.mxu0 0.0
    %619 = vmatmul.mubr.f32.gmra.mrb[0].mxu0 %v506
    %v620 = vpop.f32.mrb[0].mxu0
    %v621 = vadd.f32 0.0, %v620
    %v622 = vpop.f32.mrb[0].mxu0
    %623 = vdwg.mxu0
    %v624 = vmul.f32 %v581, 0.35355338
    %v625 = vmul.f32 %v586, 0.35355338
    %v626 = vmul.f32 %v591, 0.35355338
    %v627 = vmul.f32 %v596, 0.35355338
    %v628 = vmul.f32 %v601, 0.35355338
    %v629 = vmul.f32 %v606, 0.35355338
    %v630 = vmul.f32 %v611, 0.35355338
    %v631 = vmul.f32 %v616, 0.35355338
    %v632 = vmul.f32 %v621, 0.35355338
    %v633 = vadd.f32 %v624, %v207
    %v634 = vadd.f32 %v625, %v208
    %v635 = vadd.f32 %v626, %v209
    %v636 = vadd.f32 %v627, %v210
    %v637 = vadd.f32 %v628, %v211
    %v638 = vadd.f32 %v629, %v212
    %v639 = vadd.f32 %v630, %v213
    %v640 = vadd.f32 %v631, %v214
    %v641 = vadd.f32 %v632, %v215
    %vm642 = vcmask 146432
    %v643 = vsel %vm642, %v633, -inf
    %644 = vmax.xlane.f32.xlu0 %v643
    %v645 = vpop.xlane.xlu0 %644
    %v646 = vsel %vm642, %v634, -inf
    %647 = vmax.xlane.f32.xlu0 %v646
    %v648 = vpop.xlane.xlu0 %647
    %v649 = vsel %vm642, %v635, -inf
    %650 = vmax.xlane.f32.xlu0 %v649
    %v651 = vpop.xlane.xlu0 %650
    %v652 = vsel %vm642, %v636, -inf
    %653 = vmax.xlane.f32.xlu0 %v652
    %v654 = vpop.xlane.xlu0 %653
    %v655 = vsel %vm642, %v637, -inf
    %656 = vmax.xlane.f32.xlu0 %v655
    %v657 = vpop.xlane.xlu0 %656
    %v658 = vsel %vm642, %v638, -inf
    %659 = vmax.xlane.f32.xlu0 %v658
    %v660 = vpop.xlane.xlu0 %659
    %v661 = vsel %vm642, %v639, -inf
    %662 = vmax.xlane.f32.xlu0 %v661
    %v663 = vpop.xlane.xlu0 %662
    %v664 = vsel %vm642, %v640, -inf
    %665 = vmax.xlane.f32.xlu0 %v664
    %v666 = vpop.xlane.xlu0 %665
    %v667 = vsel %vm642, %v641, -inf
    %668 = vmax.xlane.f32.xlu0 %v667
    %v669 = vpop.xlane.xlu0 %668
    %v670 = vsub.f32 %v633, %v645
    %v671 = vsub.f32 %v634, %v648
    %v672 = vsub.f32 %v635, %v651
    %v673 = vsub.f32 %v636, %v654
    %v674 = vsub.f32 %v637, %v657
    %v675 = vsub.f32 %v638, %v660
    %v676 = vsub.f32 %v639, %v663
    %v677 = vsub.f32 %v640, %v666
    %v678 = vsub.f32 %v641, %v669
    %v679 = vmul.f32 %v670, 1.442695
    %v680 = vpow.pop %v679
    %v681 = vmul.f32 %v671, 1.442695
    %v682 = vpow.pop %v681
    %v683 = vmul.f32 %v672, 1.442695
    %v684 = vpow.pop %v683
    %v685 = vmul.f32 %v673, 1.442695
    %v686 = vpow.pop %v685
    %v687 = vmul.f32 %v674, 1.442695
    %v688 = vpow.pop %v687
    %v689 = vmul.f32 %v675, 1.442695
    %v690 = vpow.pop %v689
    %v691 = vmul.f32 %v676, 1.442695
    %v692 = vpow.pop %v691
    %v693 = vmul.f32 %v677, 1.442695
    %v694 = vpow.pop %v693
    %v695 = vmul.f32 %v678, 1.442695
    %v696 = vpow.pop %v695
    %v697 = vsel %vm642, %v680, 0.0
    %698 = vadd.xlane.f32.xlu0 %v697
    %v699 = vpop.xlane.xlu0 %698
    %v700 = vsel %vm642, %v682, 0.0
    %701 = vadd.xlane.f32.xlu0 %v700
    %v702 = vpop.xlane.xlu0 %701
    %v703 = vsel %vm642, %v684, 0.0
    %704 = vadd.xlane.f32.xlu0 %v703
    %v705 = vpop.xlane.xlu0 %704
    %v706 = vsel %vm642, %v686, 0.0
    %707 = vadd.xlane.f32.xlu0 %v706
    %v708 = vpop.xlane.xlu0 %707
    %v709 = vsel %vm642, %v688, 0.0
    %710 = vadd.xlane.f32.xlu0 %v709
    %v711 = vpop.xlane.xlu0 %710
    %v712 = vsel %vm642, %v690, 0.0
    %713 = vadd.xlane.f32.xlu0 %v712
    %v714 = vpop.xlane.xlu0 %713
    %v715 = vsel %vm642, %v692, 0.0
    %716 = vadd.xlane.f32.xlu0 %v715
    %v717 = vpop.xlane.xlu0 %716
    %v718 = vsel %vm642, %v694, 0.0
    %719 = vadd.xlane.f32.xlu0 %v718
    %v720 = vpop.xlane.xlu0 %719
    %v721 = vsel %vm642, %v696, 0.0
    %722 = vadd.xlane.f32.xlu0 %v721
    %v723 = vpop.xlane.xlu0 %722
    %v724 = vrcp.pop %v699
    %v725 = vrcp.pop %v702
    %v726 = vrcp.pop %v705
    %v727 = vrcp.pop %v708
    %v728 = vrcp.pop %v711
    %v729 = vrcp.pop %v714
    %v730 = vrcp.pop %v717
    %v731 = vrcp.pop %v720
    %v732 = vrcp.pop %v723
    %v733 = vmul.f32 %v680, %v724
    %v734 = vmul.f32 %v682, %v725
    %v735 = vmul.f32 %v684, %v726
    %v736 = vmul.f32 %v686, %v727
    %v737 = vmul.f32 %v688, %v728
    %v738 = vmul.f32 %v690, %v729
    %v739 = vmul.f32 %v692, %v730
    %v740 = vmul.f32 %v694, %v731
    %v741 = vmul.f32 %v696, %v732
    %742 = vrot.lane.b32.xlu0 %v420, 64
    %v743 = vpop.permute.xlu0 %742
    %744 = vrot.lane.b32.xlu0 %v425, 64
    %v745 = vpop.permute.xlu0 %744
    %746 = vrot.lane.b32.xlu0 %v430, 64
    %v747 = vpop.permute.xlu0 %746
    %v751 = vsel %vm642, %v733, 0
    %v754 = vsel %vm642, %v734, 0
    %v757 = vsel %vm642, %v735, 0
    %v760 = vsel %vm642, %v736, 0
    %v763 = vsel %vm642, %v737, 0
    %v766 = vsel %vm642, %v738, 0
    %v769 = vsel %vm642, %v739, 0
    %v772 = vsel %vm642, %v740, 0
    %v775 = vsel %vm642, %v741, 0
    %v777 = vsel %vm436, %v747, 0
    %779 = vmatprep.subr.mxu0 0.0
    %780 = vmatpush1.msra.mxu0 %v743
    %781 = vmatprep.subr.mxu0 0.0
    %782 = vmatpush1.msra.mxu0 %v745
    %783 = vmatprep.subr.mxu0 0.0
    %784 = vmatpush1.msra.mxu0 %v777
    %785 = vmatprep.subr.mxu0 0.0
    %786 = vmatpush1.msra.mxu0 0.0
    %787 = vmatprep.subr.mxu0 0.0
    %788 = vmatpush1.msra.mxu0 0.0
    %789 = vmatprep.subr.mxu0 0.0
    %790 = vmatpush1.msra.mxu0 0.0
    %791 = vmatprep.subr.mxu0 0.0
    %792 = vmatpush1.msra.mxu0 0.0
    %793 = vmatprep.subr.mxu0 0.0
    %794 = vmatpush1.msra.mxu0 0.0
    %795 = vmatprep.subr.mxu0 0.0
    %796 = vmatpush1.msra.mxu0 0.0
    %797 = vmatprep.subr.mxu0 0.0
    %798 = vmatpush1.msra.mxu0 0.0
    %799 = vmatprep.subr.mxu0 0.0
    %800 = vmatpush1.msra.mxu0 0.0
    %801 = vmatprep.subr.mxu0 0.0
    %802 = vmatpush1.msra.mxu0 0.0
    %803 = vmatprep.subr.mxu0 0.0
    %804 = vmatpush1.msra.mxu0 0.0
    %805 = vmatprep.subr.mxu0 0.0
    %806 = vmatpush1.msra.mxu0 0.0
    %807 = vmatprep.subr.mxu0 0.0
    %808 = vmatpush1.msra.mxu0 0.0
    %809 = vmatprep.subr.mxu0 0.0
    %810 = vmatpush1.msra.mxu0 0.0
    %811 = vmatprep.subr.mxu0 0.0
    %812 = vmatpush1.msra.mxu0 0.0
    %813 = vmatprep.subr.mxu0 0.0
    %814 = vmatpush1.msra.mxu0 0.0
    %815 = vmatprep.subr.mxu0 0.0
    %816 = vmatpush1.msra.mxu0 0.0
    %817 = vmatprep.subr.mxu0 0.0
    %818 = vmatpush1.msra.mxu0 0.0
    %819 = vmatprep.subr.mxu0 0.0
    %820 = vmatpush1.msra.mxu0 0.0
    %821 = vmatprep.subr.mxu0 0.0
    %822 = vmatpush1.msra.mxu0 0.0
    %823 = vmatprep.subr.mxu0 0.0
    %824 = vmatpush1.msra.mxu0 0.0
    %825 = vmatprep.subr.mxu0 0.0
    %826 = vmatpush1.msra.mxu0 0.0
    %827 = vmatprep.subr.mxu0 0.0
    %828 = vmatpush1.msra.mxu0 0.0
    %829 = vmatprep.subr.mxu0 0.0
    %830 = vmatpush1.msra.mxu0 0.0
    %831 = vmatprep.subr.mxu0 0.0
    %832 = vmatpush1.msra.mxu0 0.0
    %833 = vmatprep.subr.mxu0 0.0
    %834 = vmatpush1.msra.mxu0 0.0
    %835 = vmatprep.subr.mxu0 0.0
    %836 = vmatpush1.msra.mxu0 0.0
    %837 = vmatprep.subr.mxu0 0.0
    %838 = vmatpush1.msra.mxu0 0.0
    %839 = vmatprep.subr.mxu0 0.0
    %840 = vmatpush1.msra.mxu0 0.0
    %841 = vmatprep.subr.mxu0 0.0
    %842 = vmatpush1.msra.mxu0 0.0
    %843 = vmatprep.mubr.f32.mxu0 0.0
    %844 = vmatmul.mubr.f32.gmra.mrb[0].mxu0 %v751
    %v845 = vpop.f32.mrb[0].mxu0
    %v846 = vadd.f32 0.0, %v845
    %v847 = vpop.f32.mrb[0].mxu0
    %848 = vmatprep.mubr.f32.mxu0 0.0
    %849 = vmatmul.mubr.f32.gmra.mrb[0].mxu0 %v754
    %v850 = vpop.f32.mrb[0].mxu0
    %v851 = vadd.f32 0.0, %v850
    %v852 = vpop.f32.mrb[0].mxu0
    %853 = vmatprep.mubr.f32.mxu0 0.0
    %854 = vmatmul.mubr.f32.gmra.mrb[0].mxu0 %v757
    %v855 = vpop.f32.mrb[0].mxu0
    %v856 = vadd.f32 0.0, %v855
    %v857 = vpop.f32.mrb[0].mxu0
    %858 = vmatprep.mubr.f32.mxu0 0.0
    %859 = vmatmul.mubr.f32.gmra.mrb[0].mxu0 %v760
    %v860 = vpop.f32.mrb[0].mxu0
    %v861 = vadd.f32 0.0, %v860
    %v862 = vpop.f32.mrb[0].mxu0
    %863 = vmatprep.mubr.f32.mxu0 0.0
    %864 = vmatmul.mubr.f32.gmra.mrb[0].mxu0 %v763
    %v865 = vpop.f32.mrb[0].mxu0
    %v866 = vadd.f32 0.0, %v865
    %v867 = vpop.f32.mrb[0].mxu0
    %868 = vmatprep.mubr.f32.mxu0 0.0
    %869 = vmatmul.mubr.f32.gmra.mrb[0].mxu0 %v766
    %v870 = vpop.f32.mrb[0].mxu0
    %v871 = vadd.f32 0.0, %v870
    %v872 = vpop.f32.mrb[0].mxu0
    %873 = vmatprep.mubr.f32.mxu0 0.0
    %874 = vmatmul.mubr.f32.gmra.mrb[0].mxu0 %v769
    %v875 = vpop.f32.mrb[0].mxu0
    %v876 = vadd.f32 0.0, %v875
    %v877 = vpop.f32.mrb[0].mxu0
    %878 = vmatprep.mubr.f32.mxu0 0.0
    %879 = vmatmul.mubr.f32.gmra.mrb[0].mxu0 %v772
    %v880 = vpop.f32.mrb[0].mxu0
    %v881 = vadd.f32 0.0, %v880
    %v882 = vpop.f32.mrb[0].mxu0
    %883 = vmatprep.mubr.f32.mxu0 0.0
    %884 = vmatmul.mubr.f32.gmra.mrb[0].mxu0 %v775
    %v885 = vpop.f32.mrb[0].mxu0
    %v886 = vadd.f32 0.0, %v885
    %v887 = vpop.f32.mrb[0].mxu0
    %888 = vdwg.mxu0
    %v889 = vmul.f32 %v846, %v275
    %v890 = vmul.f32 %v851, %v276
    %v891 = vmul.f32 %v856, %v277
    %v892 = vmul.f32 %v861, %v278
    %v893 = vmul.f32 %v866, %v279
    %v894 = vmul.f32 %v871, %v280
    %v895 = vmul.f32 %v876, %v281
    %v896 = vmul.f32 %v881, %v282
    %v897 = vmul.f32 %v886, %v283
    %v901 = vrot.slane %v891, 2
    %v902 = vrot.slane %v892, 2
    %v903 = vsel %vm454, %v901, %v902
    %v904 = vrot.slane %v893, 2
    %v905 = vsel %vm454, %v902, %v904
    %v909 = vadd.f32 %v889, %v903
    %v910 = vadd.f32 %v890, %v905
    %v911 = vadd.f32 %v891, %v904
    %v914 = vrot.slane %v893, 4
    %v915 = vrot.slane %v894, 4
    %v916 = vsel %vm445, %v914, %v915
    %v917 = vrot.slane %v895, 4
    %v918 = vsel %vm445, %v915, %v917
    %v922 = vadd.f32 %v909, %v916
    %v923 = vadd.f32 %v910, %v918
    %v924 = vadd.f32 %v911, %v917
    %v927 = vrot.slane %v895, 6
    %v928 = vrot.slane %v896, 6
    %v929 = vsel %vm436, %v927, %v928
    %v930 = vrot.slane %v897, 6
    %v931 = vsel %vm436, %v928, %v930
    %v935 = vadd.f32 %v922, %v929
    %v936 = vadd.f32 %v923, %v931
    %v937 = vadd.f32 %v924, %v930
    %v938 = vld [vmem:[%s9] sm:$0xff]
    %v939 = vld [vmem:[%s9 + $0x8] sm:$0xff]
    %v940 = vld [vmem:[%s9 + $0x10] sm:$0xff]
    %v941 = vld [vmem:[%s9 + $0x18] sm:$0xff]
    %v943 = vsel %vm67, %v935, 0
    %v946 = vsel %vm67, %v936, 0
    %v949 = vsel %vm67, %v937, 0
    %951 = vmatprep.subr.mxu0 0.0
    %952 = vmatpush1.msra.mxu0 %v938
    %953 = vmatprep.subr.mxu0 0.0
    %954 = vmatpush1.msra.mxu0 %v939
    %955 = vmatprep.subr.mxu0 0.0
    %956 = vmatpush1.msra.mxu0 %v940
    %957 = vmatprep.subr.mxu0 0.0
    %958 = vmatpush1.msra.mxu0 %v941
    %959 = vmatprep.subr.mxu0 0.0
    %960 = vmatpush1.msra.mxu0 0.0
    %961 = vmatprep.subr.mxu0 0.0
    %962 = vmatpush1.msra.mxu0 0.0
    %963 = vmatprep.subr.mxu0 0.0
    %964 = vmatpush1.msra.mxu0 0.0
    %965 = vmatprep.subr.mxu0 0.0
    %966 = vmatpush1.msra.mxu0 0.0
    %967 = vmatprep.subr.mxu0 0.0
    %968 = vmatpush1.msra.mxu0 0.0
    %969 = vmatprep.subr.mxu0 0.0
    %970 = vmatpush1.msra.mxu0 0.0
    %971 = vmatprep.subr.mxu0 0.0
    %972 = vmatpush1.msra.mxu0 0.0
    %973 = vmatprep.subr.mxu0 0.0
    %974 = vmatpush1.msra.mxu0 0.0
    %975 = vmatprep.subr.mxu0 0.0
    %976 = vmatpush1.msra.mxu0 0.0
    %977 = vmatprep.subr.mxu0 0.0
    %978 = vmatpush1.msra.mxu0 0.0
    %979 = vmatprep.subr.mxu0 0.0
    %980 = vmatpush1.msra.mxu0 0.0
    %981 = vmatprep.subr.mxu0 0.0
    %982 = vmatpush1.msra.mxu0 0.0
    %983 = vmatprep.subr.mxu0 0.0
    %984 = vmatpush1.msra.mxu0 0.0
    %985 = vmatprep.subr.mxu0 0.0
    %986 = vmatpush1.msra.mxu0 0.0
    %987 = vmatprep.subr.mxu0 0.0
    %988 = vmatpush1.msra.mxu0 0.0
    %989 = vmatprep.subr.mxu0 0.0
    %990 = vmatpush1.msra.mxu0 0.0
    %991 = vmatprep.subr.mxu0 0.0
    %992 = vmatpush1.msra.mxu0 0.0
    %993 = vmatprep.subr.mxu0 0.0
    %994 = vmatpush1.msra.mxu0 0.0
    %995 = vmatprep.subr.mxu0 0.0
    %996 = vmatpush1.msra.mxu0 0.0
    %997 = vmatprep.subr.mxu0 0.0
    %998 = vmatpush1.msra.mxu0 0.0
    %999 = vmatprep.subr.mxu0 0.0
    %1000 = vmatpush1.msra.mxu0 0.0
    %1001 = vmatprep.subr.mxu0 0.0
    %1002 = vmatpush1.msra.mxu0 0.0
    %1003 = vmatprep.subr.mxu0 0.0
    %1004 = vmatpush1.msra.mxu0 0.0
    %1005 = vmatprep.subr.mxu0 0.0
    %1006 = vmatpush1.msra.mxu0 0.0
    %1007 = vmatprep.subr.mxu0 0.0
    %1008 = vmatpush1.msra.mxu0 0.0
    %1009 = vmatprep.subr.mxu0 0.0
    %1010 = vmatpush1.msra.mxu0 0.0
    %1011 = vmatprep.subr.mxu0 0.0
    %1012 = vmatpush1.msra.mxu0 0.0
    %1013 = vmatprep.subr.mxu0 0.0
    %1014 = vmatpush1.msra.mxu0 0.0
    %1015 = vmatprep.mubr.f32.mxu0 0.0
    %1016 = vmatmul.mubr.f32.gmra.mrb[0].mxu0 %v943
    %v1017 = vpop.f32.mrb[0].mxu0
    %v1018 = vadd.f32 0.0, %v1017
    %v1019 = vpop.f32.mrb[0].mxu0
    %1020 = vmatprep.mubr.f32.mxu0 0.0
    %1021 = vmatmul.mubr.f32.gmra.mrb[0].mxu0 %v946
    %v1022 = vpop.f32.mrb[0].mxu0
    %v1023 = vadd.f32 0.0, %v1022
    %v1024 = vpop.f32.mrb[0].mxu0
    %1025 = vmatprep.mubr.f32.mxu0 0.0
    %1026 = vmatmul.mubr.f32.gmra.mrb[0].mxu0 %v949
    %v1027 = vpop.f32.mrb[0].mxu0
    %v1028 = vadd.f32 0.0, %v1027
    %v1029 = vpop.f32.mrb[0].mxu0
    %1030 = vdwg.mxu0
    %v1031 = vadd.f32 %v337, %v1018
    %v1032 = vadd.f32 %v338, %v1023
    %v1033 = vadd.f32 %v339, %v1028
    %v1034 = vsel %vm67, %v1031, 0.0
    %1035 = vadd.xlane.f32.xlu0 %v1034
    %v1036 = vpop.xlane.xlu0 %1035
    %v1037 = vsel %vm67, %v1032, 0.0
    %1038 = vadd.xlane.f32.xlu0 %v1037
    %v1039 = vpop.xlane.xlu0 %1038
    %v1040 = vsel %vm291, %v1033, 0.0
    %1041 = vadd.xlane.f32.xlu0 %v1040
    %v1042 = vpop.xlane.xlu0 %1041
    %v1043 = vmul.f32 %v1036, %v295
    %v1044 = vmul.f32 %v1039, %v295
    %v1045 = vmul.f32 %v1042, %v295
    %v1046 = vsub.f32 %v1031, %v1043
    %v1047 = vsub.f32 %v1032, %v1044
    %v1048 = vsub.f32 %v1033, %v1045
    %v1049 = vmul.f32 %v1046, %v1046
    %v1050 = vmul.f32 %v1047, %v1047
    %v1051 = vmul.f32 %v1048, %v1048
    %v1052 = vsel %vm67, %v1049, 0.0
    %1053 = vadd.xlane.f32.xlu0 %v1052
    %v1054 = vpop.xlane.xlu0 %1053
    %v1055 = vsel %vm67, %v1050, 0.0
    %1056 = vadd.xlane.f32.xlu0 %v1055
    %v1057 = vpop.xlane.xlu0 %1056
    %v1058 = vsel %vm291, %v1051, 0.0
    %1059 = vadd.xlane.f32.xlu0 %v1058
    %v1060 = vpop.xlane.xlu0 %1059
    %v1061 = vmul.f32 %v1054, %v295
    %v1062 = vmul.f32 %v1057, %v295
    %v1063 = vmul.f32 %v1060, %v295
    %v1064 = vadd.f32 %v1061, 1e-05
    %v1065 = vadd.f32 %v1062, 1e-05
    %v1066 = vadd.f32 %v1063, 1e-05
    %v1067 = vrsqrt.pop %v1064
    %v1068 = vrsqrt.pop %v1065
    %v1069 = vrsqrt.pop %v1066
    %v1070 = vmul.f32 %v1046, %v1067
    %v1071 = vmul.f32 %v1047, %v1068
    %v1072 = vmul.f32 %v1048, %v1069
    %v1073 = vlaneseq
    %v1074 = vshrl.u32 %v1073, 7
    %v1075 = vsub.s32 2, %v1074
    %v1076 = vrot.slane %v284, %v1075
    %v1077 = vmul.f32 %v1070, %v1076
    %v1078 = vmul.f32 %v1071, %v1076
    %v1079 = vmul.f32 %v1072, %v1076
    %v1080 = vlaneseq
    %v1081 = vshrl.u32 %v1080, 7
    %v1082 = vsub.s32 3, %v1081
    %v1083 = vrot.slane %v284, %v1082
    %v1084 = vadd.f32 %v1077, %v1083
    %v1085 = vadd.f32 %v1078, %v1083
    %v1086 = vadd.f32 %v1079, %v1083
    %v1087 = vld [vmem:[%s10] sm:$0xff]
    %v1088 = vld [vmem:[%s10 + $0x8] sm:$0xff]
    %v1089 = vld [vmem:[%s10 + $0x10] sm:$0xff]
    %v1090 = vld [vmem:[%s10 + $0x18] sm:$0xff]
    %v1091 = vld [vmem:[%s11] sm:$0x1]
    %v1093 = vlaneseq
    %v1094 = vshrl.u32 %v1093, 7
    %v1095 = vsub.s32 0, %v1094
    %v1096 = vrot.slane %v1091, %v1095
    %v1099 = vsel %vm67, %v1084, 0
    %v1102 = vsel %vm67, %v1085, 0
    %v1105 = vsel %vm67, %v1086, 0
    %1107 = vmatprep.subr.mxu0 0.0
    %1108 = vmatpush1.msra.mxu0 %v1087
    %1109 = vmatprep.subr.mxu0 0.0
    %1110 = vmatpush1.msra.mxu0 %v1088
    %1111 = vmatprep.subr.mxu0 0.0
    %1112 = vmatpush1.msra.mxu0 %v1089
    %1113 = vmatprep.subr.mxu0 0.0
    %1114 = vmatpush1.msra.mxu0 %v1090
    %1115 = vmatprep.subr.mxu0 0.0
    %1116 = vmatpush1.msra.mxu0 0.0
    %1117 = vmatprep.subr.mxu0 0.0
    %1118 = vmatpush1.msra.mxu0 0.0
    %1119 = vmatprep.subr.mxu0 0.0
    %1120 = vmatpush1.msra.mxu0 0.0
    %1121 = vmatprep.subr.mxu0 0.0
    %1122 = vmatpush1.msra.mxu0 0.0
    %1123 = vmatprep.subr.mxu0 0.0
    %1124 = vmatpush1.msra.mxu0 0.0
    %1125 = vmatprep.subr.mxu0 0.0
    %1126 = vmatpush1.msra.mxu0 0.0
    %1127 = vmatprep.subr.mxu0 0.0
    %1128 = vmatpush1.msra.mxu0 0.0
    %1129 = vmatprep.subr.mxu0 0.0
    %1130 = vmatpush1.msra.mxu0 0.0
    %1131 = vmatprep.subr.mxu0 0.0
    %1132 = vmatpush1.msra.mxu0 0.0
    %1133 = vmatprep.subr.mxu0 0.0
    %1134 = vmatpush1.msra.mxu0 0.0
    %1135 = vmatprep.subr.mxu0 0.0
    %1136 = vmatpush1.msra.mxu0 0.0
    %1137 = vmatprep.subr.mxu0 0.0
    %1138 = vmatpush1.msra.mxu0 0.0
    %1139 = vmatprep.subr.mxu0 0.0
    %1140 = vmatpush1.msra.mxu0 0.0
    %1141 = vmatprep.subr.mxu0 0.0
    %1142 = vmatpush1.msra.mxu0 0.0
    %1143 = vmatprep.subr.mxu0 0.0
    %1144 = vmatpush1.msra.mxu0 0.0
    %1145 = vmatprep.subr.mxu0 0.0
    %1146 = vmatpush1.msra.mxu0 0.0
    %1147 = vmatprep.subr.mxu0 0.0
    %1148 = vmatpush1.msra.mxu0 0.0
    %1149 = vmatprep.subr.mxu0 0.0
    %1150 = vmatpush1.msra.mxu0 0.0
    %1151 = vmatprep.subr.mxu0 0.0
    %1152 = vmatpush1.msra.mxu0 0.0
    %1153 = vmatprep.subr.mxu0 0.0
    %1154 = vmatpush1.msra.mxu0 0.0
    %1155 = vmatprep.subr.mxu0 0.0
    %1156 = vmatpush1.msra.mxu0 0.0
    %1157 = vmatprep.subr.mxu0 0.0
    %1158 = vmatpush1.msra.mxu0 0.0
    %1159 = vmatprep.subr.mxu0 0.0
    %1160 = vmatpush1.msra.mxu0 0.0
    %1161 = vmatprep.subr.mxu0 0.0
    %1162 = vmatpush1.msra.mxu0 0.0
    %1163 = vmatprep.subr.mxu0 0.0
    %1164 = vmatpush1.msra.mxu0 0.0
    %1165 = vmatprep.subr.mxu0 0.0
    %1166 = vmatpush1.msra.mxu0 0.0
    %1167 = vmatprep.subr.mxu0 0.0
    %1168 = vmatpush1.msra.mxu0 0.0
    %1169 = vmatprep.subr.mxu0 0.0
    %1170 = vmatpush1.msra.mxu0 0.0
    %1171 = vmatprep.mubr.f32.mxu0 0.0
    %1172 = vmatmul.mubr.f32.gmra.mrb[0].mxu0 %v1099
    %v1173 = vpop.f32.mrb[0].mxu0
    %v1174 = vadd.f32 %v1096, %v1173
    %v1175 = vpop.f32.mrb[0].mxu0
    %1176 = vmatprep.mubr.f32.mxu0 0.0
    %1177 = vmatmul.mubr.f32.gmra.mrb[0].mxu0 %v1102
    %v1178 = vpop.f32.mrb[0].mxu0
    %v1179 = vadd.f32 %v1096, %v1178
    %v1180 = vpop.f32.mrb[0].mxu0
    %1181 = vmatprep.mubr.f32.mxu0 0.0
    %1182 = vmatmul.mubr.f32.gmra.mrb[0].mxu0 %v1105
    %v1183 = vpop.f32.mrb[0].mxu0
    %v1184 = vadd.f32 %v1096, %v1183
    %v1185 = vpop.f32.mrb[0].mxu0
    %1186 = vdwg.mxu0
    %v1187 = vmul.f32 %v1174, 0.5
    %v1188 = vmul.f32 %v1179, 0.5
    %v1189 = vmul.f32 %v1184, 0.5
    %v1190 = vmul.f32 %v1174, 0.70710677
    %v1191 = vmul.f32 %v1179, 0.70710677
    %v1192 = vmul.f32 %v1184, 0.70710677
    %v1193 = verf.f32.pop %v1190
    %v1194 = verf.f32.pop %v1191
    %v1195 = verf.f32.pop %v1192
    %v1196 = vadd.f32 %v1193, 1.0
    %v1197 = vadd.f32 %v1194, 1.0
    %v1198 = vadd.f32 %v1195, 1.0
    %v1199 = vmul.f32 %v1187, %v1196
    %v1200 = vmul.f32 %v1188, %v1197
    %v1201 = vmul.f32 %v1189, %v1198
    %v1202 = vld [vmem:[%s12] sm:$0xff]
    %v1203 = vld [vmem:[%s12 + $0x8] sm:$0xff]
    %v1204 = vld [vmem:[%s12 + $0x10] sm:$0xff]
    %v1205 = vld [vmem:[%s12 + $0x18] sm:$0xff]
    %v1206 = vld [vmem:[%s12 + $0x20] sm:$0xff]
    %v1207 = vld [vmem:[%s12 + $0x28] sm:$0xff]
    %v1208 = vld [vmem:[%s12 + $0x30] sm:$0xff]
    %v1209 = vld [vmem:[%s12 + $0x38] sm:$0xff]
    %v1210 = vld [vmem:[%s13] sm:$0x1]
    %v1212 = vlaneseq
    %v1213 = vshrl.u32 %v1212, 7
    %v1214 = vsub.s32 0, %v1213
    %v1215 = vrot.slane %v1210, %v1214
    %vm1217 = vcmask 523264
    %v1219 = vsel %vm1217, %v1199, 0
    %v1222 = vsel %vm1217, %v1200, 0
    %v1225 = vsel %vm1217, %v1201, 0
    %1227 = vmatprep.subr.mxu0 0.0
    %1228 = vmatpush1.msra.mxu0 %v1202
    %1229 = vmatprep.subr.mxu0 0.0
    %1230 = vmatpush1.msra.mxu0 %v1203
    %1231 = vmatprep.subr.mxu0 0.0
    %1232 = vmatpush1.msra.mxu0 %v1204
    %1233 = vmatprep.subr.mxu0 0.0
    %1234 = vmatpush1.msra.mxu0 %v1205
    %1235 = vmatprep.subr.mxu0 0.0
    %1236 = vmatpush1.msra.mxu0 %v1206
    %1237 = vmatprep.subr.mxu0 0.0
    %1238 = vmatpush1.msra.mxu0 %v1207
    %1239 = vmatprep.subr.mxu0 0.0
    %1240 = vmatpush1.msra.mxu0 %v1208
    %1241 = vmatprep.subr.mxu0 0.0
    %1242 = vmatpush1.msra.mxu0 %v1209
    %1243 = vmatprep.subr.mxu0 0.0
    %1244 = vmatpush1.msra.mxu0 0.0
    %1245 = vmatprep.subr.mxu0 0.0
    %1246 = vmatpush1.msra.mxu0 0.0
    %1247 = vmatprep.subr.mxu0 0.0
    %1248 = vmatpush1.msra.mxu0 0.0
    %1249 = vmatprep.subr.mxu0 0.0
    %1250 = vmatpush1.msra.mxu0 0.0
    %1251 = vmatprep.subr.mxu0 0.0
    %1252 = vmatpush1.msra.mxu0 0.0
    %1253 = vmatprep.subr.mxu0 0.0
    %1254 = vmatpush1.msra.mxu0 0.0
    %1255 = vmatprep.subr.mxu0 0.0
    %1256 = vmatpush1.msra.mxu0 0.0
    %1257 = vmatprep.subr.mxu0 0.0
    %1258 = vmatpush1.msra.mxu0 0.0
    %1259 = vmatprep.subr.mxu0 0.0
    %1260 = vmatpush1.msra.mxu0 0.0
    %1261 = vmatprep.subr.mxu0 0.0
    %1262 = vmatpush1.msra.mxu0 0.0
    %1263 = vmatprep.subr.mxu0 0.0
    %1264 = vmatpush1.msra.mxu0 0.0
    %1265 = vmatprep.subr.mxu0 0.0
    %1266 = vmatpush1.msra.mxu0 0.0
    %1267 = vmatprep.subr.mxu0 0.0
    %1268 = vmatpush1.msra.mxu0 0.0
    %1269 = vmatprep.subr.mxu0 0.0
    %1270 = vmatpush1.msra.mxu0 0.0
    %1271 = vmatprep.subr.mxu0 0.0
    %1272 = vmatpush1.msra.mxu0 0.0
    %1273 = vmatprep.subr.mxu0 0.0
    %1274 = vmatpush1.msra.mxu0 0.0
    %1275 = vmatprep.subr.mxu0 0.0
    %1276 = vmatpush1.msra.mxu0 0.0
    %1277 = vmatprep.subr.mxu0 0.0
    %1278 = vmatpush1.msra.mxu0 0.0
    %1279 = vmatprep.subr.mxu0 0.0
    %1280 = vmatpush1.msra.mxu0 0.0
    %1281 = vmatprep.subr.mxu0 0.0
    %1282 = vmatpush1.msra.mxu0 0.0
    %1283 = vmatprep.subr.mxu0 0.0
    %1284 = vmatpush1.msra.mxu0 0.0
    %1285 = vmatprep.subr.mxu0 0.0
    %1286 = vmatpush1.msra.mxu0 0.0
    %1287 = vmatprep.subr.mxu0 0.0
    %1288 = vmatpush1.msra.mxu0 0.0
    %1289 = vmatprep.subr.mxu0 0.0
    %1290 = vmatpush1.msra.mxu0 0.0
    %1291 = vmatprep.mubr.f32.mxu0 0.0
    %1292 = vmatmul.mubr.f32.gmra.mrb[0].mxu0 %v1219
    %v1293 = vpop.f32.mrb[0].mxu0
    %v1294 = vadd.f32 %v1215, %v1293
    %v1295 = vpop.f32.mrb[0].mxu0
    %1296 = vmatprep.mubr.f32.mxu0 0.0
    %1297 = vmatmul.mubr.f32.gmra.mrb[0].mxu0 %v1222
    %v1298 = vpop.f32.mrb[0].mxu0
    %v1299 = vadd.f32 %v1215, %v1298
    %v1300 = vpop.f32.mrb[0].mxu0
    %1301 = vmatprep.mubr.f32.mxu0 0.0
    %1302 = vmatmul.mubr.f32.gmra.mrb[0].mxu0 %v1225
    %v1303 = vpop.f32.mrb[0].mxu0
    %v1304 = vadd.f32 %v1215, %v1303
    %v1305 = vpop.f32.mrb[0].mxu0
    %1306 = vdwg.mxu0
    %v1307 = vadd.f32 %v337, %v1294
    %v1308 = vadd.f32 %v338, %v1299
    %v1309 = vadd.f32 %v339, %v1304
    %s1310 = scalar_lea.vmem %s7, 4
    %v1311 = vld [vmem:[%s1310] sm:$0xf]
    %v1312 = vsel %vm67, %v1307, 0.0
    %1313 = vadd.xlane.f32.xlu0 %v1312
    %v1314 = vpop.xlane.xlu0 %1313
    %v1315 = vsel %vm67, %v1308, 0.0
    %1316 = vadd.xlane.f32.xlu0 %v1315
    %v1317 = vpop.xlane.xlu0 %1316
    %v1318 = vsel %vm291, %v1309, 0.0
    %1319 = vadd.xlane.f32.xlu0 %v1318
    %v1320 = vpop.xlane.xlu0 %1319
    %v1321 = vmul.f32 %v1314, %v295
    %v1322 = vmul.f32 %v1317, %v295
    %v1323 = vmul.f32 %v1320, %v295
    %v1324 = vsub.f32 %v1307, %v1321
    %v1325 = vsub.f32 %v1308, %v1322
    %v1326 = vsub.f32 %v1309, %v1323
    %v1327 = vmul.f32 %v1324, %v1324
    %v1328 = vmul.f32 %v1325, %v1325
    %v1329 = vmul.f32 %v1326, %v1326
    %v1330 = vsel %vm67, %v1327, 0.0
    %1331 = vadd.xlane.f32.xlu0 %v1330
    %v1332 = vpop.xlane.xlu0 %1331
    %v1333 = vsel %vm67, %v1328, 0.0
    %1334 = vadd.xlane.f32.xlu0 %v1333
    %v1335 = vpop.xlane.xlu0 %1334
    %v1336 = vsel %vm291, %v1329, 0.0
    %1337 = vadd.xlane.f32.xlu0 %v1336
    %v1338 = vpop.xlane.xlu0 %1337
    %v1339 = vmul.f32 %v1332, %v295
    %v1340 = vmul.f32 %v1335, %v295
    %v1341 = vmul.f32 %v1338, %v295
    %v1342 = vadd.f32 %v1339, 1e-05
    %v1343 = vadd.f32 %v1340, 1e-05
    %v1344 = vadd.f32 %v1341, 1e-05
    %v1345 = vrsqrt.pop %v1342
    %v1346 = vrsqrt.pop %v1343
    %v1347 = vrsqrt.pop %v1344
    %v1348 = vmul.f32 %v1324, %v1345
    %v1349 = vmul.f32 %v1325, %v1346
    %v1350 = vmul.f32 %v1326, %v1347
    %v1351 = vlaneseq
    %v1352 = vshrl.u32 %v1351, 7
    %v1353 = vsub.s32 0, %v1352
    %v1354 = vrot.slane %v1311, %v1353
    %v1355 = vmul.f32 %v1348, %v1354
    %v1356 = vmul.f32 %v1349, %v1354
    %v1357 = vmul.f32 %v1350, %v1354
    %v1358 = vlaneseq
    %v1359 = vshrl.u32 %v1358, 7
    %v1360 = vsub.s32 1, %v1359
    %v1361 = vrot.slane %v1311, %v1360
    %v1362 = vadd.f32 %v1355, %v1361
    %v1363 = vadd.f32 %v1356, %v1361
    %v1364 = vadd.f32 %v1357, %v1361
    %s1365 = scalar_lea.vmem %s8, 32
    %v1366 = vld [vmem:[%s1365] sm:$0xff]
    %v1367 = vld [vmem:[%s1365 + $0x8] sm:$0xff]
    %v1368 = vld [vmem:[%s1365 + $0x10] sm:$0xff]
    %v1369 = vld [vmem:[%s1365 + $0x18] sm:$0xff]
    %v1371 = vsel %vm67, %v1362, 0
    %v1374 = vsel %vm67, %v1363, 0
    %v1377 = vsel %vm67, %v1364, 0
    %1379 = vmatprep.subr.mxu0 0.0
    %1380 = vmatpush1.msra.mxu0 %v1366
    %1381 = vmatprep.subr.mxu0 0.0
    %1382 = vmatpush1.msra.mxu0 %v1367
    %1383 = vmatprep.subr.mxu0 0.0
    %1384 = vmatpush1.msra.mxu0 %v1368
    %1385 = vmatprep.subr.mxu0 0.0
    %1386 = vmatpush1.msra.mxu0 %v1369
    %1387 = vmatprep.subr.mxu0 0.0
    %1388 = vmatpush1.msra.mxu0 0.0
    %1389 = vmatprep.subr.mxu0 0.0
    %1390 = vmatpush1.msra.mxu0 0.0
    %1391 = vmatprep.subr.mxu0 0.0
    %1392 = vmatpush1.msra.mxu0 0.0
    %1393 = vmatprep.subr.mxu0 0.0
    %1394 = vmatpush1.msra.mxu0 0.0
    %1395 = vmatprep.subr.mxu0 0.0
    %1396 = vmatpush1.msra.mxu0 0.0
    %1397 = vmatprep.subr.mxu0 0.0
    %1398 = vmatpush1.msra.mxu0 0.0
    %1399 = vmatprep.subr.mxu0 0.0
    %1400 = vmatpush1.msra.mxu0 0.0
    %1401 = vmatprep.subr.mxu0 0.0
    %1402 = vmatpush1.msra.mxu0 0.0
    %1403 = vmatprep.subr.mxu0 0.0
    %1404 = vmatpush1.msra.mxu0 0.0
    %1405 = vmatprep.subr.mxu0 0.0
    %1406 = vmatpush1.msra.mxu0 0.0
    %1407 = vmatprep.subr.mxu0 0.0
    %1408 = vmatpush1.msra.mxu0 0.0
    %1409 = vmatprep.subr.mxu0 0.0
    %1410 = vmatpush1.msra.mxu0 0.0
    %1411 = vmatprep.subr.mxu0 0.0
    %1412 = vmatpush1.msra.mxu0 0.0
    %1413 = vmatprep.subr.mxu0 0.0
    %1414 = vmatpush1.msra.mxu0 0.0
    %1415 = vmatprep.subr.mxu0 0.0
    %1416 = vmatpush1.msra.mxu0 0.0
    %1417 = vmatprep.subr.mxu0 0.0
    %1418 = vmatpush1.msra.mxu0 0.0
    %1419 = vmatprep.subr.mxu0 0.0
    %1420 = vmatpush1.msra.mxu0 0.0
    %1421 = vmatprep.subr.mxu0 0.0
    %1422 = vmatpush1.msra.mxu0 0.0
    %1423 = vmatprep.subr.mxu0 0.0
    %1424 = vmatpush1.msra.mxu0 0.0
    %1425 = vmatprep.subr.mxu0 0.0
    %1426 = vmatpush1.msra.mxu0 0.0
    %1427 = vmatprep.subr.mxu0 0.0
    %1428 = vmatpush1.msra.mxu0 0.0
    %1429 = vmatprep.subr.mxu0 0.0
    %1430 = vmatpush1.msra.mxu0 0.0
    %1431 = vmatprep.subr.mxu0 0.0
    %1432 = vmatpush1.msra.mxu0 0.0
    %1433 = vmatprep.subr.mxu0 0.0
    %1434 = vmatpush1.msra.mxu0 0.0
    %1435 = vmatprep.subr.mxu0 0.0
    %1436 = vmatpush1.msra.mxu0 0.0
    %1437 = vmatprep.subr.mxu0 0.0
    %1438 = vmatpush1.msra.mxu0 0.0
    %1439 = vmatprep.subr.mxu0 0.0
    %1440 = vmatpush1.msra.mxu0 0.0
    %1441 = vmatprep.subr.mxu0 0.0
    %1442 = vmatpush1.msra.mxu0 0.0
    %1443 = vmatprep.mubr.f32.mxu0 0.0
    %1444 = vmatmul.mubr.f32.gmra.mrb[0].mxu0 %v1371
    %v1445 = vpop.f32.mrb[0].mxu0
    %v1446 = vadd.f32 0.0, %v1445
    %v1447 = vpop.f32.mrb[0].mxu0
    %1448 = vmatprep.mubr.f32.mxu0 0.0
    %1449 = vmatmul.mubr.f32.gmra.mrb[0].mxu0 %v1374
    %v1450 = vpop.f32.mrb[0].mxu0
    %v1451 = vadd.f32 0.0, %v1450
    %v1452 = vpop.f32.mrb[0].mxu0
    %1453 = vmatprep.mubr.f32.mxu0 0.0
    %1454 = vmatmul.mubr.f32.gmra.mrb[0].mxu0 %v1377
    %v1455 = vpop.f32.mrb[0].mxu0
    %v1456 = vadd.f32 0.0, %v1455
    %v1457 = vpop.f32.mrb[0].mxu0
    %1458 = vdwg.mxu0
    %v1462 = vrot.slane %v1446, 6
    %v1463 = vrot.slane %v1451, 6
    %v1464 = vsel %vm436, %v1462, %v1463
    %v1465 = vrot.slane %v1456, 6
    %v1466 = vsel %vm436, %v1463, %v1465
    %v1470 = vrot.slane %v1446, 4
    %v1471 = vrot.slane %v1451, 4
    %v1472 = vsel %vm445, %v1470, %v1471
    %v1473 = vrot.slane %v1456, 4
    %v1474 = vsel %vm445, %v1471, %v1473
    %v1478 = vrot.slane %v1446, 2
    %v1479 = vrot.slane %v1451, 2
    %v1480 = vsel %vm454, %v1478, %v1479
    %v1481 = vrot.slane %v1456, 2
    %v1482 = vsel %vm454, %v1479, %v1481
    %v1486 = vsel %vm436, %v1456, %v1462
    %v1487 = vsel %vm445, %v1466, %v1470
    %v1488 = vsel %vm454, %v1474, %v1478
    %v1489 = vmul.f32 %v1446, %v275
    %v1490 = vmul.f32 %v1451, %v276
    %v1491 = vmul.f32 %v1486, %v277
    %v1492 = vmul.f32 %v1464, %v278
    %v1493 = vmul.f32 %v1487, %v279
    %v1494 = vmul.f32 %v1472, %v280
    %v1495 = vmul.f32 %v1488, %v281
    %v1496 = vmul.f32 %v1480, %v282
    %v1497 = vmul.f32 %v1482, %v283
    %1498 = vrot.lane.b32.xlu0 %v1446, 96
    %v1499 = vpop.permute.xlu0 %1498
    %1500 = vrot.lane.b32.xlu0 %v1451, 96
    %v1501 = vpop.permute.xlu0 %1500
    %1502 = vrot.lane.b32.xlu0 %v1456, 96
    %v1503 = vpop.permute.xlu0 %1502
    %v1505 = vsel %vm67, %v1489, 0
    %v1508 = vsel %vm67, %v1490, 0
    %v1511 = vsel %vm67, %v1491, 0
    %v1514 = vsel %vm67, %v1492, 0
    %v1517 = vsel %vm67, %v1493, 0
    %v1520 = vsel %vm67, %v1494, 0
    %v1523 = vsel %vm67, %v1495, 0
    %v1526 = vsel %vm67, %v1496, 0
    %v1529 = vsel %vm67, %v1497, 0
    %v1531 = vsel %vm67, %v1499, 0
    %v1533 = vsel %vm67, %v1501, 0
    %v1535 = vsel %vm67, %v1503, 0
    %1537 = vmatprep.subr.mxu0 0.0
    %1538 = vmatpush1.xpose.msra.mxu0 %v1531
    %1539 = vmatprep.subr.mxu0 0.0
    %1540 = vmatpush1.xpose.msra.mxu0 %v1533
    %1541 = vmatprep.subr.mxu0 0.0
    %1542 = vmatpush1.xpose.msra.mxu0 %v1535
    %1543 = vmatprep.subr.mxu0 0.0
    %1544 = vmatpush1.xpose.msra.mxu0 0.0
    %1545 = vmatprep.subr.mxu0 0.0
    %1546 = vmatpush1.xpose.msra.mxu0 0.0
    %1547 = vmatprep.subr.mxu0 0.0
    %1548 = vmatpush1.xpose.msra.mxu0 0.0
    %1549 = vmatprep.subr.mxu0 0.0
    %1550 = vmatpush1.xpose.msra.mxu0 0.0
    %1551 = vmatprep.subr.mxu0 0.0
    %1552 = vmatpush1.xpose.msra.mxu0 0.0
    %1553 = vmatprep.subr.mxu0 0.0
    %1554 = vmatpush1.xpose.msra.mxu0 0.0
    %1555 = vmatprep.subr.mxu0 0.0
    %1556 = vmatpush1.xpose.msra.mxu0 0.0
    %1557 = vmatprep.subr.mxu0 0.0
    %1558 = vmatpush1.xpose.msra.mxu0 0.0
    %1559 = vmatprep.subr.mxu0 0.0
    %1560 = vmatpush1.xpose.msra.mxu0 0.0
    %1561 = vmatprep.subr.mxu0 0.0
    %1562 = vmatpush1.xpose.msra.mxu0 0.0
    %1563 = vmatprep.subr.mxu0 0.0
    %1564 = vmatpush1.xpose.msra.mxu0 0.0
    %1565 = vmatprep.subr.mxu0 0.0
    %1566 = vmatpush1.xpose.msra.mxu0 0.0
    %1567 = vmatprep.subr.mxu0 0.0
    %1568 = vmatpush1.xpose.msra.mxu0 0.0
    %1569 = vmatprep.subr.mxu0 0.0
    %1570 = vmatpush1.xpose.msra.mxu0 0.0
    %1571 = vmatprep.subr.mxu0 0.0
    %1572 = vmatpush1.xpose.msra.mxu0 0.0
    %1573 = vmatprep.subr.mxu0 0.0
    %1574 = vmatpush1.xpose.msra.mxu0 0.0
    %1575 = vmatprep.subr.mxu0 0.0
    %1576 = vmatpush1.xpose.msra.mxu0 0.0
    %1577 = vmatprep.subr.mxu0 0.0
    %1578 = vmatpush1.xpose.msra.mxu0 0.0
    %1579 = vmatprep.subr.mxu0 0.0
    %1580 = vmatpush1.xpose.msra.mxu0 0.0
    %1581 = vmatprep.subr.mxu0 0.0
    %1582 = vmatpush1.xpose.msra.mxu0 0.0
    %1583 = vmatprep.subr.mxu0 0.0
    %1584 = vmatpush1.xpose.msra.mxu0 0.0
    %1585 = vmatprep.subr.mxu0 0.0
    %1586 = vmatpush1.xpose.msra.mxu0 0.0
    %1587 = vmatprep.subr.mxu0 0.0
    %1588 = vmatpush1.xpose.msra.mxu0 0.0
    %1589 = vmatprep.subr.mxu0 0.0
    %1590 = vmatpush1.xpose.msra.mxu0 0.0
    %1591 = vmatprep.subr.mxu0 0.0
    %1592 = vmatpush1.xpose.msra.mxu0 0.0
    %1593 = vmatprep.subr.mxu0 0.0
    %1594 = vmatpush1.xpose.msra.mxu0 0.0
    %1595 = vmatprep.subr.mxu0 0.0
    %1596 = vmatpush1.xpose.msra.mxu0 0.0
    %1597 = vmatprep.subr.mxu0 0.0
    %1598 = vmatpush1.xpose.msra.mxu0 0.0
    %1599 = vmatprep.subr.mxu0 0.0
    %1600 = vmatpush1.xpose.msra.mxu0 0.0
    %1601 = vmatprep.mubr.f32.mxu0 0.0
    %1602 = vmatmul.mubr.f32.gmra.mrb[0].mxu0 %v1505
    %v1603 = vpop.f32.mrb[0].mxu0
    %v1604 = vadd.f32 0.0, %v1603
    %v1605 = vpop.f32.mrb[0].mxu0
    %1606 = vmatprep.mubr.f32.mxu0 0.0
    %1607 = vmatmul.mubr.f32.gmra.mrb[0].mxu0 %v1508
    %v1608 = vpop.f32.mrb[0].mxu0
    %v1609 = vadd.f32 0.0, %v1608
    %v1610 = vpop.f32.mrb[0].mxu0
    %1611 = vmatprep.mubr.f32.mxu0 0.0
    %1612 = vmatmul.mubr.f32.gmra.mrb[0].mxu0 %v1511
    %v1613 = vpop.f32.mrb[0].mxu0
    %v1614 = vadd.f32 0.0, %v1613
    %v1615 = vpop.f32.mrb[0].mxu0
    %1616 = vmatprep.mubr.f32.mxu0 0.0
    %1617 = vmatmul.mubr.f32.gmra.mrb[0].mxu0 %v1514
    %v1618 = vpop.f32.mrb[0].mxu0
    %v1619 = vadd.f32 0.0, %v1618
    %v1620 = vpop.f32.mrb[0].mxu0
    %1621 = vmatprep.mubr.f32.mxu0 0.0
    %1622 = vmatmul.mubr.f32.gmra.mrb[0].mxu0 %v1517
    %v1623 = vpop.f32.mrb[0].mxu0
    %v1624 = vadd.f32 0.0, %v1623
    %v1625 = vpop.f32.mrb[0].mxu0
    %1626 = vmatprep.mubr.f32.mxu0 0.0
    %1627 = vmatmul.mubr.f32.gmra.mrb[0].mxu0 %v1520
    %v1628 = vpop.f32.mrb[0].mxu0
    %v1629 = vadd.f32 0.0, %v1628
    %v1630 = vpop.f32.mrb[0].mxu0
    %1631 = vmatprep.mubr.f32.mxu0 0.0
    %1632 = vmatmul.mubr.f32.gmra.mrb[0].mxu0 %v1523
    %v1633 = vpop.f32.mrb[0].mxu0
    %v1634 = vadd.f32 0.0, %v1633
    %v1635 = vpop.f32.mrb[0].mxu0
    %1636 = vmatprep.mubr.f32.mxu0 0.0
    %1637 = vmatmul.mubr.f32.gmra.mrb[0].mxu0 %v1526
    %v1638 = vpop.f32.mrb[0].mxu0
    %v1639 = vadd.f32 0.0, %v1638
    %v1640 = vpop.f32.mrb[0].mxu0
    %1641 = vmatprep.mubr.f32.mxu0 0.0
    %1642 = vmatmul.mubr.f32.gmra.mrb[0].mxu0 %v1529
    %v1643 = vpop.f32.mrb[0].mxu0
    %v1644 = vadd.f32 0.0, %v1643
    %v1645 = vpop.f32.mrb[0].mxu0
    %1646 = vdwg.mxu0
    %v1647 = vmul.f32 %v1604, 0.35355338
    %v1648 = vmul.f32 %v1609, 0.35355338
    %v1649 = vmul.f32 %v1614, 0.35355338
    %v1650 = vmul.f32 %v1619, 0.35355338
    %v1651 = vmul.f32 %v1624, 0.35355338
    %v1652 = vmul.f32 %v1629, 0.35355338
    %v1653 = vmul.f32 %v1634, 0.35355338
    %v1654 = vmul.f32 %v1639, 0.35355338
    %v1655 = vmul.f32 %v1644, 0.35355338
    %v1656 = vadd.f32 %v1647, %v207
    %v1657 = vadd.f32 %v1648, %v208
    %v1658 = vadd.f32 %v1649, %v209
    %v1659 = vadd.f32 %v1650, %v210
    %v1660 = vadd.f32 %v1651, %v211
    %v1661 = vadd.f32 %v1652, %v212
    %v1662 = vadd.f32 %v1653, %v213
    %v1663 = vadd.f32 %v1654, %v214
    %v1664 = vadd.f32 %v1655, %v215
    %v1665 = vsel %vm642, %v1656, -inf
    %1666 = vmax.xlane.f32.xlu0 %v1665
    %v1667 = vpop.xlane.xlu0 %1666
    %v1668 = vsel %vm642, %v1657, -inf
    %1669 = vmax.xlane.f32.xlu0 %v1668
    %v1670 = vpop.xlane.xlu0 %1669
    %v1671 = vsel %vm642, %v1658, -inf
    %1672 = vmax.xlane.f32.xlu0 %v1671
    %v1673 = vpop.xlane.xlu0 %1672
    %v1674 = vsel %vm642, %v1659, -inf
    %1675 = vmax.xlane.f32.xlu0 %v1674
    %v1676 = vpop.xlane.xlu0 %1675
    %v1677 = vsel %vm642, %v1660, -inf
    %1678 = vmax.xlane.f32.xlu0 %v1677
    %v1679 = vpop.xlane.xlu0 %1678
    %v1680 = vsel %vm642, %v1661, -inf
    %1681 = vmax.xlane.f32.xlu0 %v1680
    %v1682 = vpop.xlane.xlu0 %1681
    %v1683 = vsel %vm642, %v1662, -inf
    %1684 = vmax.xlane.f32.xlu0 %v1683
    %v1685 = vpop.xlane.xlu0 %1684
    %v1686 = vsel %vm642, %v1663, -inf
    %1687 = vmax.xlane.f32.xlu0 %v1686
    %v1688 = vpop.xlane.xlu0 %1687
    %v1689 = vsel %vm642, %v1664, -inf
    %1690 = vmax.xlane.f32.xlu0 %v1689
    %v1691 = vpop.xlane.xlu0 %1690
    %v1692 = vsub.f32 %v1656, %v1667
    %v1693 = vsub.f32 %v1657, %v1670
    %v1694 = vsub.f32 %v1658, %v1673
    %v1695 = vsub.f32 %v1659, %v1676
    %v1696 = vsub.f32 %v1660, %v1679
    %v1697 = vsub.f32 %v1661, %v1682
    %v1698 = vsub.f32 %v1662, %v1685
    %v1699 = vsub.f32 %v1663, %v1688
    %v1700 = vsub.f32 %v1664, %v1691
    %v1701 = vmul.f32 %v1692, 1.442695
    %v1702 = vpow.pop %v1701
    %v1703 = vmul.f32 %v1693, 1.442695
    %v1704 = vpow.pop %v1703
    %v1705 = vmul.f32 %v1694, 1.442695
    %v1706 = vpow.pop %v1705
    %v1707 = vmul.f32 %v1695, 1.442695
    %v1708 = vpow.pop %v1707
    %v1709 = vmul.f32 %v1696, 1.442695
    %v1710 = vpow.pop %v1709
    %v1711 = vmul.f32 %v1697, 1.442695
    %v1712 = vpow.pop %v1711
    %v1713 = vmul.f32 %v1698, 1.442695
    %v1714 = vpow.pop %v1713
    %v1715 = vmul.f32 %v1699, 1.442695
    %v1716 = vpow.pop %v1715
    %v1717 = vmul.f32 %v1700, 1.442695
    %v1718 = vpow.pop %v1717
    %v1719 = vsel %vm642, %v1702, 0.0
    %1720 = vadd.xlane.f32.xlu0 %v1719
    %v1721 = vpop.xlane.xlu0 %1720
    %v1722 = vsel %vm642, %v1704, 0.0
    %1723 = vadd.xlane.f32.xlu0 %v1722
    %v1724 = vpop.xlane.xlu0 %1723
    %v1725 = vsel %vm642, %v1706, 0.0
    %1726 = vadd.xlane.f32.xlu0 %v1725
    %v1727 = vpop.xlane.xlu0 %1726
    %v1728 = vsel %vm642, %v1708, 0.0
    %1729 = vadd.xlane.f32.xlu0 %v1728
    %v1730 = vpop.xlane.xlu0 %1729
    %v1731 = vsel %vm642, %v1710, 0.0
    %1732 = vadd.xlane.f32.xlu0 %v1731
    %v1733 = vpop.xlane.xlu0 %1732
    %v1734 = vsel %vm642, %v1712, 0.0
    %1735 = vadd.xlane.f32.xlu0 %v1734
    %v1736 = vpop.xlane.xlu0 %1735
    %v1737 = vsel %vm642, %v1714, 0.0
    %1738 = vadd.xlane.f32.xlu0 %v1737
    %v1739 = vpop.xlane.xlu0 %1738
    %v1740 = vsel %vm642, %v1716, 0.0
    %1741 = vadd.xlane.f32.xlu0 %v1740
    %v1742 = vpop.xlane.xlu0 %1741
    %v1743 = vsel %vm642, %v1718, 0.0
    %1744 = vadd.xlane.f32.xlu0 %v1743
    %v1745 = vpop.xlane.xlu0 %1744
    %v1746 = vrcp.pop %v1721
    %v1747 = vrcp.pop %v1724
    %v1748 = vrcp.pop %v1727
    %v1749 = vrcp.pop %v1730
    %v1750 = vrcp.pop %v1733
    %v1751 = vrcp.pop %v1736
    %v1752 = vrcp.pop %v1739
    %v1753 = vrcp.pop %v1742
    %v1754 = vrcp.pop %v1745
    %v1755 = vmul.f32 %v1702, %v1746
    %v1756 = vmul.f32 %v1704, %v1747
    %v1757 = vmul.f32 %v1706, %v1748
    %v1758 = vmul.f32 %v1708, %v1749
    %v1759 = vmul.f32 %v1710, %v1750
    %v1760 = vmul.f32 %v1712, %v1751
    %v1761 = vmul.f32 %v1714, %v1752
    %v1762 = vmul.f32 %v1716, %v1753
    %v1763 = vmul.f32 %v1718, %v1754
    %1764 = vrot.lane.b32.xlu0 %v1446, 64
    %v1765 = vpop.permute.xlu0 %1764
    %1766 = vrot.lane.b32.xlu0 %v1451, 64
    %v1767 = vpop.permute.xlu0 %1766
    %1768 = vrot.lane.b32.xlu0 %v1456, 64
    %v1769 = vpop.permute.xlu0 %1768
    %v1773 = vsel %vm642, %v1755, 0
    %v1776 = vsel %vm642, %v1756, 0
    %v1779 = vsel %vm642, %v1757, 0
    %v1782 = vsel %vm642, %v1758, 0
    %v1785 = vsel %vm642, %v1759, 0
    %v1788 = vsel %vm642, %v1760, 0
    %v1791 = vsel %vm642, %v1761, 0
    %v1794 = vsel %vm642, %v1762, 0
    %v1797 = vsel %vm642, %v1763, 0
    %v1799 = vsel %vm436, %v1769, 0
    %1801 = vmatprep.subr.mxu0 0.0
    %1802 = vmatpush1.msra.mxu0 %v1765
    %1803 = vmatprep.subr.mxu0 0.0
    %1804 = vmatpush1.msra.mxu0 %v1767
    %1805 = vmatprep.subr.mxu0 0.0
    %1806 = vmatpush1.msra.mxu0 %v1799
    %1807 = vmatprep.subr.mxu0 0.0
    %1808 = vmatpush1.msra.mxu0 0.0
    %1809 = vmatprep.subr.mxu0 0.0
    %1810 = vmatpush1.msra.mxu0 0.0
    %1811 = vmatprep.subr.mxu0 0.0
    %1812 = vmatpush1.msra.mxu0 0.0
    %1813 = vmatprep.subr.mxu0 0.0
    %1814 = vmatpush1.msra.mxu0 0.0
    %1815 = vmatprep.subr.mxu0 0.0
    %1816 = vmatpush1.msra.mxu0 0.0
    %1817 = vmatprep.subr.mxu0 0.0
    %1818 = vmatpush1.msra.mxu0 0.0
    %1819 = vmatprep.subr.mxu0 0.0
    %1820 = vmatpush1.msra.mxu0 0.0
    %1821 = vmatprep.subr.mxu0 0.0
    %1822 = vmatpush1.msra.mxu0 0.0
    %1823 = vmatprep.subr.mxu0 0.0
    %1824 = vmatpush1.msra.mxu0 0.0
    %1825 = vmatprep.subr.mxu0 0.0
    %1826 = vmatpush1.msra.mxu0 0.0
    %1827 = vmatprep.subr.mxu0 0.0
    %1828 = vmatpush1.msra.mxu0 0.0
    %1829 = vmatprep.subr.mxu0 0.0
    %1830 = vmatpush1.msra.mxu0 0.0
    %1831 = vmatprep.subr.mxu0 0.0
    %1832 = vmatpush1.msra.mxu0 0.0
    %1833 = vmatprep.subr.mxu0 0.0
    %1834 = vmatpush1.msra.mxu0 0.0
    %1835 = vmatprep.subr.mxu0 0.0
    %1836 = vmatpush1.msra.mxu0 0.0
    %1837 = vmatprep.subr.mxu0 0.0
    %1838 = vmatpush1.msra.mxu0 0.0
    %1839 = vmatprep.subr.mxu0 0.0
    %1840 = vmatpush1.msra.mxu0 0.0
    %1841 = vmatprep.subr.mxu0 0.0
    %1842 = vmatpush1.msra.mxu0 0.0
    %1843 = vmatprep.subr.mxu0 0.0
    %1844 = vmatpush1.msra.mxu0 0.0
    %1845 = vmatprep.subr.mxu0 0.0
    %1846 = vmatpush1.msra.mxu0 0.0
    %1847 = vmatprep.subr.mxu0 0.0
    %1848 = vmatpush1.msra.mxu0 0.0
    %1849 = vmatprep.subr.mxu0 0.0
    %1850 = vmatpush1.msra.mxu0 0.0
    %1851 = vmatprep.subr.mxu0 0.0
    %1852 = vmatpush1.msra.mxu0 0.0
    %1853 = vmatprep.subr.mxu0 0.0
    %1854 = vmatpush1.msra.mxu0 0.0
    %1855 = vmatprep.subr.mxu0 0.0
    %1856 = vmatpush1.msra.mxu0 0.0
    %1857 = vmatprep.subr.mxu0 0.0
    %1858 = vmatpush1.msra.mxu0 0.0
    %1859 = vmatprep.subr.mxu0 0.0
    %1860 = vmatpush1.msra.mxu0 0.0
    %1861 = vmatprep.subr.mxu0 0.0
    %1862 = vmatpush1.msra.mxu0 0.0
    %1863 = vmatprep.subr.mxu0 0.0
    %1864 = vmatpush1.msra.mxu0 0.0
    %1865 = vmatprep.mubr.f32.mxu0 0.0
    %1866 = vmatmul.mubr.f32.gmra.mrb[0].mxu0 %v1773
    %v1867 = vpop.f32.mrb[0].mxu0
    %v1868 = vadd.f32 0.0, %v1867
    %v1869 = vpop.f32.mrb[0].mxu0
    %1870 = vmatprep.mubr.f32.mxu0 0.0
    %1871 = vmatmul.mubr.f32.gmra.mrb[0].mxu0 %v1776
    %v1872 = vpop.f32.mrb[0].mxu0
    %v1873 = vadd.f32 0.0, %v1872
    %v1874 = vpop.f32.mrb[0].mxu0
    %1875 = vmatprep.mubr.f32.mxu0 0.0
    %1876 = vmatmul.mubr.f32.gmra.mrb[0].mxu0 %v1779
    %v1877 = vpop.f32.mrb[0].mxu0
    %v1878 = vadd.f32 0.0, %v1877
    %v1879 = vpop.f32.mrb[0].mxu0
    %1880 = vmatprep.mubr.f32.mxu0 0.0
    %1881 = vmatmul.mubr.f32.gmra.mrb[0].mxu0 %v1782
    %v1882 = vpop.f32.mrb[0].mxu0
    %v1883 = vadd.f32 0.0, %v1882
    %v1884 = vpop.f32.mrb[0].mxu0
    %1885 = vmatprep.mubr.f32.mxu0 0.0
    %1886 = vmatmul.mubr.f32.gmra.mrb[0].mxu0 %v1785
    %v1887 = vpop.f32.mrb[0].mxu0
    %v1888 = vadd.f32 0.0, %v1887
    %v1889 = vpop.f32.mrb[0].mxu0
    %1890 = vmatprep.mubr.f32.mxu0 0.0
    %1891 = vmatmul.mubr.f32.gmra.mrb[0].mxu0 %v1788
    %v1892 = vpop.f32.mrb[0].mxu0
    %v1893 = vadd.f32 0.0, %v1892
    %v1894 = vpop.f32.mrb[0].mxu0
    %1895 = vmatprep.mubr.f32.mxu0 0.0
    %1896 = vmatmul.mubr.f32.gmra.mrb[0].mxu0 %v1791
    %v1897 = vpop.f32.mrb[0].mxu0
    %v1898 = vadd.f32 0.0, %v1897
    %v1899 = vpop.f32.mrb[0].mxu0
    %1900 = vmatprep.mubr.f32.mxu0 0.0
    %1901 = vmatmul.mubr.f32.gmra.mrb[0].mxu0 %v1794
    %v1902 = vpop.f32.mrb[0].mxu0
    %v1903 = vadd.f32 0.0, %v1902
    %v1904 = vpop.f32.mrb[0].mxu0
    %1905 = vmatprep.mubr.f32.mxu0 0.0
    %1906 = vmatmul.mubr.f32.gmra.mrb[0].mxu0 %v1797
    %v1907 = vpop.f32.mrb[0].mxu0
    %v1908 = vadd.f32 0.0, %v1907
    %v1909 = vpop.f32.mrb[0].mxu0
    %1910 = vdwg.mxu0
    %v1911 = vmul.f32 %v1868, %v275
    %v1912 = vmul.f32 %v1873, %v276
    %v1913 = vmul.f32 %v1878, %v277
    %v1914 = vmul.f32 %v1883, %v278
    %v1915 = vmul.f32 %v1888, %v279
    %v1916 = vmul.f32 %v1893, %v280
    %v1917 = vmul.f32 %v1898, %v281
    %v1918 = vmul.f32 %v1903, %v282
    %v1919 = vmul.f32 %v1908, %v283
    %v1923 = vrot.slane %v1913, 2
    %v1924 = vrot.slane %v1914, 2
    %v1925 = vsel %vm454, %v1923, %v1924
    %v1926 = vrot.slane %v1915, 2
    %v1927 = vsel %vm454, %v1924, %v1926
    %v1931 = vadd.f32 %v1911, %v1925
    %v1932 = vadd.f32 %v1912, %v1927
    %v1933 = vadd.f32 %v1913, %v1926
    %v1936 = vrot.slane %v1915, 4
    %v1937 = vrot.slane %v1916, 4
    %v1938 = vsel %vm445, %v1936, %v1937
    %v1939 = vrot.slane %v1917, 4
    %v1940 = vsel %vm445, %v1937, %v1939
    %v1944 = vadd.f32 %v1931, %v1938
    %v1945 = vadd.f32 %v1932, %v1940
    %v1946 = vadd.f32 %v1933, %v1939
    %v1949 = vrot.slane %v1917, 6
    %v1950 = vrot.slane %v1918, 6
    %v1951 = vsel %vm436, %v1949, %v1950
    %v1952 = vrot.slane %v1919, 6
    %v1953 = vsel %vm436, %v1950, %v1952
    %v1957 = vadd.f32 %v1944, %v1951
    %v1958 = vadd.f32 %v1945, %v1953
    %v1959 = vadd.f32 %v1946, %v1952
    %s1960 = scalar_lea.vmem %s9, 32
    %v1961 = vld [vmem:[%s1960] sm:$0xff]
    %v1962 = vld [vmem:[%s1960 + $0x8] sm:$0xff]
    %v1963 = vld [vmem:[%s1960 + $0x10] sm:$0xff]
    %v1964 = vld [vmem:[%s1960 + $0x18] sm:$0xff]
    %v1966 = vsel %vm67, %v1957, 0
    %v1969 = vsel %vm67, %v1958, 0
    %v1972 = vsel %vm67, %v1959, 0
    %1974 = vmatprep.subr.mxu0 0.0
    %1975 = vmatpush1.msra.mxu0 %v1961
    %1976 = vmatprep.subr.mxu0 0.0
    %1977 = vmatpush1.msra.mxu0 %v1962
    %1978 = vmatprep.subr.mxu0 0.0
    %1979 = vmatpush1.msra.mxu0 %v1963
    %1980 = vmatprep.subr.mxu0 0.0
    %1981 = vmatpush1.msra.mxu0 %v1964
    %1982 = vmatprep.subr.mxu0 0.0
    %1983 = vmatpush1.msra.mxu0 0.0
    %1984 = vmatprep.subr.mxu0 0.0
    %1985 = vmatpush1.msra.mxu0 0.0
    %1986 = vmatprep.subr.mxu0 0.0
    %1987 = vmatpush1.msra.mxu0 0.0
    %1988 = vmatprep.subr.mxu0 0.0
    %1989 = vmatpush1.msra.mxu0 0.0
    %1990 = vmatprep.subr.mxu0 0.0
    %1991 = vmatpush1.msra.mxu0 0.0
    %1992 = vmatprep.subr.mxu0 0.0
    %1993 = vmatpush1.msra.mxu0 0.0
    %1994 = vmatprep.subr.mxu0 0.0
    %1995 = vmatpush1.msra.mxu0 0.0
    %1996 = vmatprep.subr.mxu0 0.0
    %1997 = vmatpush1.msra.mxu0 0.0
    %1998 = vmatprep.subr.mxu0 0.0
    %1999 = vmatpush1.msra.mxu0 0.0
    %2000 = vmatprep.subr.mxu0 0.0
    %2001 = vmatpush1.msra.mxu0 0.0
    %2002 = vmatprep.subr.mxu0 0.0
    %2003 = vmatpush1.msra.mxu0 0.0
    %2004 = vmatprep.subr.mxu0 0.0
    %2005 = vmatpush1.msra.mxu0 0.0
    %2006 = vmatprep.subr.mxu0 0.0
    %2007 = vmatpush1.msra.mxu0 0.0
    %2008 = vmatprep.subr.mxu0 0.0
    %2009 = vmatpush1.msra.mxu0 0.0
    %2010 = vmatprep.subr.mxu0 0.0
    %2011 = vmatpush1.msra.mxu0 0.0
    %2012 = vmatprep.subr.mxu0 0.0
    %2013 = vmatpush1.msra.mxu0 0.0
    %2014 = vmatprep.subr.mxu0 0.0
    %2015 = vmatpush1.msra.mxu0 0.0
    %2016 = vmatprep.subr.mxu0 0.0
    %2017 = vmatpush1.msra.mxu0 0.0
    %2018 = vmatprep.subr.mxu0 0.0
    %2019 = vmatpush1.msra.mxu0 0.0
    %2020 = vmatprep.subr.mxu0 0.0
    %2021 = vmatpush1.msra.mxu0 0.0
    %2022 = vmatprep.subr.mxu0 0.0
    %2023 = vmatpush1.msra.mxu0 0.0
    %2024 = vmatprep.subr.mxu0 0.0
    %2025 = vmatpush1.msra.mxu0 0.0
    %2026 = vmatprep.subr.mxu0 0.0
    %2027 = vmatpush1.msra.mxu0 0.0
    %2028 = vmatprep.subr.mxu0 0.0
    %2029 = vmatpush1.msra.mxu0 0.0
    %2030 = vmatprep.subr.mxu0 0.0
    %2031 = vmatpush1.msra.mxu0 0.0
    %2032 = vmatprep.subr.mxu0 0.0
    %2033 = vmatpush1.msra.mxu0 0.0
    %2034 = vmatprep.subr.mxu0 0.0
    %2035 = vmatpush1.msra.mxu0 0.0
    %2036 = vmatprep.subr.mxu0 0.0
    %2037 = vmatpush1.msra.mxu0 0.0
    %2038 = vmatprep.mubr.f32.mxu0 0.0
    %2039 = vmatmul.mubr.f32.gmra.mrb[0].mxu0 %v1966
    %v2040 = vpop.f32.mrb[0].mxu0
    %v2041 = vadd.f32 0.0, %v2040
    %v2042 = vpop.f32.mrb[0].mxu0
    %2043 = vmatprep.mubr.f32.mxu0 0.0
    %2044 = vmatmul.mubr.f32.gmra.mrb[0].mxu0 %v1969
    %v2045 = vpop.f32.mrb[0].mxu0
    %v2046 = vadd.f32 0.0, %v2045
    %v2047 = vpop.f32.mrb[0].mxu0
    %2048 = vmatprep.mubr.f32.mxu0 0.0
    %2049 = vmatmul.mubr.f32.gmra.mrb[0].mxu0 %v1972
    %v2050 = vpop.f32.mrb[0].mxu0
    %v2051 = vadd.f32 0.0, %v2050
    %v2052 = vpop.f32.mrb[0].mxu0
    %2053 = vdwg.mxu0
    %v2054 = vadd.f32 %v1362, %v2041
    %v2055 = vadd.f32 %v1363, %v2046
    %v2056 = vadd.f32 %v1364, %v2051
    %v2057 = vsel %vm67, %v2054, 0.0
    %2058 = vadd.xlane.f32.xlu0 %v2057
    %v2059 = vpop.xlane.xlu0 %2058
    %v2060 = vsel %vm67, %v2055, 0.0
    %2061 = vadd.xlane.f32.xlu0 %v2060
    %v2062 = vpop.xlane.xlu0 %2061
    %v2063 = vsel %vm291, %v2056, 0.0
    %2064 = vadd.xlane.f32.xlu0 %v2063
    %v2065 = vpop.xlane.xlu0 %2064
    %v2066 = vmul.f32 %v2059, %v295
    %v2067 = vmul.f32 %v2062, %v295
    %v2068 = vmul.f32 %v2065, %v295
    %v2069 = vsub.f32 %v2054, %v2066
    %v2070 = vsub.f32 %v2055, %v2067
    %v2071 = vsub.f32 %v2056, %v2068
    %v2072 = vmul.f32 %v2069, %v2069
    %v2073 = vmul.f32 %v2070, %v2070
    %v2074 = vmul.f32 %v2071, %v2071
    %v2075 = vsel %vm67, %v2072, 0.0
    %2076 = vadd.xlane.f32.xlu0 %v2075
    %v2077 = vpop.xlane.xlu0 %2076
    %v2078 = vsel %vm67, %v2073, 0.0
    %2079 = vadd.xlane.f32.xlu0 %v2078
    %v2080 = vpop.xlane.xlu0 %2079
    %v2081 = vsel %vm291, %v2074, 0.0
    %2082 = vadd.xlane.f32.xlu0 %v2081
    %v2083 = vpop.xlane.xlu0 %2082
    %v2084 = vmul.f32 %v2077, %v295
    %v2085 = vmul.f32 %v2080, %v295
    %v2086 = vmul.f32 %v2083, %v295
    %v2087 = vadd.f32 %v2084, 1e-05
    %v2088 = vadd.f32 %v2085, 1e-05
    %v2089 = vadd.f32 %v2086, 1e-05
    %v2090 = vrsqrt.pop %v2087
    %v2091 = vrsqrt.pop %v2088
    %v2092 = vrsqrt.pop %v2089
    %v2093 = vmul.f32 %v2069, %v2090
    %v2094 = vmul.f32 %v2070, %v2091
    %v2095 = vmul.f32 %v2071, %v2092
    %v2096 = vlaneseq
    %v2097 = vshrl.u32 %v2096, 7
    %v2098 = vsub.s32 2, %v2097
    %v2099 = vrot.slane %v1311, %v2098
    %v2100 = vmul.f32 %v2093, %v2099
    %v2101 = vmul.f32 %v2094, %v2099
    %v2102 = vmul.f32 %v2095, %v2099
    %v2103 = vlaneseq
    %v2104 = vshrl.u32 %v2103, 7
    %v2105 = vsub.s32 3, %v2104
    %v2106 = vrot.slane %v1311, %v2105
    %v2107 = vadd.f32 %v2100, %v2106
    %v2108 = vadd.f32 %v2101, %v2106
    %v2109 = vadd.f32 %v2102, %v2106
    %s2110 = scalar_lea.vmem %s10, 32
    %v2111 = vld [vmem:[%s2110] sm:$0xff]
    %v2112 = vld [vmem:[%s2110 + $0x8] sm:$0xff]
    %v2113 = vld [vmem:[%s2110 + $0x10] sm:$0xff]
    %v2114 = vld [vmem:[%s2110 + $0x18] sm:$0xff]
    %s2115 = scalar_lea.vmem %s11, 1
    %v2116 = vld [vmem:[%s2115] sm:$0x1]
    %v2118 = vlaneseq
    %v2119 = vshrl.u32 %v2118, 7
    %v2120 = vsub.s32 0, %v2119
    %v2121 = vrot.slane %v2116, %v2120
    %v2124 = vsel %vm67, %v2107, 0
    %v2127 = vsel %vm67, %v2108, 0
    %v2130 = vsel %vm67, %v2109, 0
    %2132 = vmatprep.subr.mxu0 0.0
    %2133 = vmatpush1.msra.mxu0 %v2111
    %2134 = vmatprep.subr.mxu0 0.0
    %2135 = vmatpush1.msra.mxu0 %v2112
    %2136 = vmatprep.subr.mxu0 0.0
    %2137 = vmatpush1.msra.mxu0 %v2113
    %2138 = vmatprep.subr.mxu0 0.0
    %2139 = vmatpush1.msra.mxu0 %v2114
    %2140 = vmatprep.subr.mxu0 0.0
    %2141 = vmatpush1.msra.mxu0 0.0
    %2142 = vmatprep.subr.mxu0 0.0
    %2143 = vmatpush1.msra.mxu0 0.0
    %2144 = vmatprep.subr.mxu0 0.0
    %2145 = vmatpush1.msra.mxu0 0.0
    %2146 = vmatprep.subr.mxu0 0.0
    %2147 = vmatpush1.msra.mxu0 0.0
    %2148 = vmatprep.subr.mxu0 0.0
    %2149 = vmatpush1.msra.mxu0 0.0
    %2150 = vmatprep.subr.mxu0 0.0
    %2151 = vmatpush1.msra.mxu0 0.0
    %2152 = vmatprep.subr.mxu0 0.0
    %2153 = vmatpush1.msra.mxu0 0.0
    %2154 = vmatprep.subr.mxu0 0.0
    %2155 = vmatpush1.msra.mxu0 0.0
    %2156 = vmatprep.subr.mxu0 0.0
    %2157 = vmatpush1.msra.mxu0 0.0
    %2158 = vmatprep.subr.mxu0 0.0
    %2159 = vmatpush1.msra.mxu0 0.0
    %2160 = vmatprep.subr.mxu0 0.0
    %2161 = vmatpush1.msra.mxu0 0.0
    %2162 = vmatprep.subr.mxu0 0.0
    %2163 = vmatpush1.msra.mxu0 0.0
    %2164 = vmatprep.subr.mxu0 0.0
    %2165 = vmatpush1.msra.mxu0 0.0
    %2166 = vmatprep.subr.mxu0 0.0
    %2167 = vmatpush1.msra.mxu0 0.0
    %2168 = vmatprep.subr.mxu0 0.0
    %2169 = vmatpush1.msra.mxu0 0.0
    %2170 = vmatprep.subr.mxu0 0.0
    %2171 = vmatpush1.msra.mxu0 0.0
    %2172 = vmatprep.subr.mxu0 0.0
    %2173 = vmatpush1.msra.mxu0 0.0
    %2174 = vmatprep.subr.mxu0 0.0
    %2175 = vmatpush1.msra.mxu0 0.0
    %2176 = vmatprep.subr.mxu0 0.0
    %2177 = vmatpush1.msra.mxu0 0.0
    %2178 = vmatprep.subr.mxu0 0.0
    %2179 = vmatpush1.msra.mxu0 0.0
    %2180 = vmatprep.subr.mxu0 0.0
    %2181 = vmatpush1.msra.mxu0 0.0
    %2182 = vmatprep.subr.mxu0 0.0
    %2183 = vmatpush1.msra.mxu0 0.0
    %2184 = vmatprep.subr.mxu0 0.0
    %2185 = vmatpush1.msra.mxu0 0.0
    %2186 = vmatprep.subr.mxu0 0.0
    %2187 = vmatpush1.msra.mxu0 0.0
    %2188 = vmatprep.subr.mxu0 0.0
    %2189 = vmatpush1.msra.mxu0 0.0
    %2190 = vmatprep.subr.mxu0 0.0
    %2191 = vmatpush1.msra.mxu0 0.0
    %2192 = vmatprep.subr.mxu0 0.0
    %2193 = vmatpush1.msra.mxu0 0.0
    %2194 = vmatprep.subr.mxu0 0.0
    %2195 = vmatpush1.msra.mxu0 0.0
    %2196 = vmatprep.mubr.f32.mxu0 0.0
    %2197 = vmatmul.mubr.f32.gmra.mrb[0].mxu0 %v2124
    %v2198 = vpop.f32.mrb[0].mxu0
    %v2199 = vadd.f32 %v2121, %v2198
    %v2200 = vpop.f32.mrb[0].mxu0
    %2201 = vmatprep.mubr.f32.mxu0 0.0
    %2202 = vmatmul.mubr.f32.gmra.mrb[0].mxu0 %v2127
    %v2203 = vpop.f32.mrb[0].mxu0
    %v2204 = vadd.f32 %v2121, %v2203
    %v2205 = vpop.f32.mrb[0].mxu0
    %2206 = vmatprep.mubr.f32.mxu0 0.0
    %2207 = vmatmul.mubr.f32.gmra.mrb[0].mxu0 %v2130
    %v2208 = vpop.f32.mrb[0].mxu0
    %v2209 = vadd.f32 %v2121, %v2208
    %v2210 = vpop.f32.mrb[0].mxu0
    %2211 = vdwg.mxu0
    %v2212 = vmul.f32 %v2199, 0.5
    %v2213 = vmul.f32 %v2204, 0.5
    %v2214 = vmul.f32 %v2209, 0.5
    %v2215 = vmul.f32 %v2199, 0.70710677
    %v2216 = vmul.f32 %v2204, 0.70710677
    %v2217 = vmul.f32 %v2209, 0.70710677
    %v2218 = verf.f32.pop %v2215
    %v2219 = verf.f32.pop %v2216
    %v2220 = verf.f32.pop %v2217
    %v2221 = vadd.f32 %v2218, 1.0
    %v2222 = vadd.f32 %v2219, 1.0
    %v2223 = vadd.f32 %v2220, 1.0
    %v2224 = vmul.f32 %v2212, %v2221
    %v2225 = vmul.f32 %v2213, %v2222
    %v2226 = vmul.f32 %v2214, %v2223
    %s2227 = scalar_lea.vmem %s12, 64
    %v2228 = vld [vmem:[%s2227] sm:$0xff]
    %v2229 = vld [vmem:[%s2227 + $0x8] sm:$0xff]
    %v2230 = vld [vmem:[%s2227 + $0x10] sm:$0xff]
    %v2231 = vld [vmem:[%s2227 + $0x18] sm:$0xff]
    %v2232 = vld [vmem:[%s2227 + $0x20] sm:$0xff]
    %v2233 = vld [vmem:[%s2227 + $0x28] sm:$0xff]
    %v2234 = vld [vmem:[%s2227 + $0x30] sm:$0xff]
    %v2235 = vld [vmem:[%s2227 + $0x38] sm:$0xff]
    %s2236 = scalar_lea.vmem %s13, 1
    %v2237 = vld [vmem:[%s2236] sm:$0x1]
    %v2239 = vlaneseq
    %v2240 = vshrl.u32 %v2239, 7
    %v2241 = vsub.s32 0, %v2240
    %v2242 = vrot.slane %v2237, %v2241
    %v2245 = vsel %vm1217, %v2224, 0
    %v2248 = vsel %vm1217, %v2225, 0
    %v2251 = vsel %vm1217, %v2226, 0
    %2253 = vmatprep.subr.mxu0 0.0
    %2254 = vmatpush1.msra.mxu0 %v2228
    %2255 = vmatprep.subr.mxu0 0.0
    %2256 = vmatpush1.msra.mxu0 %v2229
    %2257 = vmatprep.subr.mxu0 0.0
    %2258 = vmatpush1.msra.mxu0 %v2230
    %2259 = vmatprep.subr.mxu0 0.0
    %2260 = vmatpush1.msra.mxu0 %v2231
    %2261 = vmatprep.subr.mxu0 0.0
    %2262 = vmatpush1.msra.mxu0 %v2232
    %2263 = vmatprep.subr.mxu0 0.0
    %2264 = vmatpush1.msra.mxu0 %v2233
    %2265 = vmatprep.subr.mxu0 0.0
    %2266 = vmatpush1.msra.mxu0 %v2234
    %2267 = vmatprep.subr.mxu0 0.0
    %2268 = vmatpush1.msra.mxu0 %v2235
    %2269 = vmatprep.subr.mxu0 0.0
    %2270 = vmatpush1.msra.mxu0 0.0
    %2271 = vmatprep.subr.mxu0 0.0
    %2272 = vmatpush1.msra.mxu0 0.0
    %2273 = vmatprep.subr.mxu0 0.0
    %2274 = vmatpush1.msra.mxu0 0.0
    %2275 = vmatprep.subr.mxu0 0.0
    %2276 = vmatpush1.msra.mxu0 0.0
    %2277 = vmatprep.subr.mxu0 0.0
    %2278 = vmatpush1.msra.mxu0 0.0
    %2279 = vmatprep.subr.mxu0 0.0
    %2280 = vmatpush1.msra.mxu0 0.0
    %2281 = vmatprep.subr.mxu0 0.0
    %2282 = vmatpush1.msra.mxu0 0.0
    %2283 = vmatprep.subr.mxu0 0.0
    %2284 = vmatpush1.msra.mxu0 0.0
    %2285 = vmatprep.subr.mxu0 0.0
    %2286 = vmatpush1.msra.mxu0 0.0
    %2287 = vmatprep.subr.mxu0 0.0
    %2288 = vmatpush1.msra.mxu0 0.0
    %2289 = vmatprep.subr.mxu0 0.0
    %2290 = vmatpush1.msra.mxu0 0.0
    %2291 = vmatprep.subr.mxu0 0.0
    %2292 = vmatpush1.msra.mxu0 0.0
    %2293 = vmatprep.subr.mxu0 0.0
    %2294 = vmatpush1.msra.mxu0 0.0
    %2295 = vmatprep.subr.mxu0 0.0
    %2296 = vmatpush1.msra.mxu0 0.0
    %2297 = vmatprep.subr.mxu0 0.0
    %2298 = vmatpush1.msra.mxu0 0.0
    %2299 = vmatprep.subr.mxu0 0.0
    %2300 = vmatpush1.msra.mxu0 0.0
    %2301 = vmatprep.subr.mxu0 0.0
    %2302 = vmatpush1.msra.mxu0 0.0
    %2303 = vmatprep.subr.mxu0 0.0
    %2304 = vmatpush1.msra.mxu0 0.0
    %2305 = vmatprep.subr.mxu0 0.0
    %2306 = vmatpush1.msra.mxu0 0.0
    %2307 = vmatprep.subr.mxu0 0.0
    %2308 = vmatpush1.msra.mxu0 0.0
    %2309 = vmatprep.subr.mxu0 0.0
    %2310 = vmatpush1.msra.mxu0 0.0
    %2311 = vmatprep.subr.mxu0 0.0
    %2312 = vmatpush1.msra.mxu0 0.0
    %2313 = vmatprep.subr.mxu0 0.0
    %2314 = vmatpush1.msra.mxu0 0.0
    %2315 = vmatprep.subr.mxu0 0.0
    %2316 = vmatpush1.msra.mxu0 0.0
    %2317 = vmatprep.mubr.f32.mxu0 0.0
    %2318 = vmatmul.mubr.f32.gmra.mrb[0].mxu0 %v2245
    %v2319 = vpop.f32.mrb[0].mxu0
    %v2320 = vadd.f32 %v2242, %v2319
    %v2321 = vpop.f32.mrb[0].mxu0
    %2322 = vmatprep.mubr.f32.mxu0 0.0
    %2323 = vmatmul.mubr.f32.gmra.mrb[0].mxu0 %v2248
    %v2324 = vpop.f32.mrb[0].mxu0
    %v2325 = vadd.f32 %v2242, %v2324
    %v2326 = vpop.f32.mrb[0].mxu0
    %2327 = vmatprep.mubr.f32.mxu0 0.0
    %2328 = vmatmul.mubr.f32.gmra.mrb[0].mxu0 %v2251
    %v2329 = vpop.f32.mrb[0].mxu0
    %v2330 = vpop.f32.mrb[0].mxu0
    %2331 = vdwg.mxu0
    %v2332 = vadd.f32 %v1362, %v2320
    %v2333 = vadd.f32 %v1363, %v2325
    %vm2334 = vcmask 1040384
    %v2335 = vsel %vm2334, %v2332, %v2333
    %v2336 = vld [vmem:[%s14] sm:$0x3]
    %v2337 = vsel %vm291, %v2335, 0.0
    %2338 = vadd.xlane.f32.xlu0 %v2337
    %v2339 = vpop.xlane.xlu0 %2338
    %v2340 = vmul.f32 %v2339, %v295
    %v2341 = vsub.f32 %v2335, %v2340
    %v2342 = vmul.f32 %v2341, %v2341
    %v2343 = vsel %vm291, %v2342, 0.0
    %2344 = vadd.xlane.f32.xlu0 %v2343
    %v2345 = vpop.xlane.xlu0 %2344
    %v2346 = vmul.f32 %v2345, %v295
    %v2347 = vadd.f32 %v2346, 1e-05
    %v2348 = vrsqrt.pop %v2347
    %v2349 = vmul.f32 %v2341, %v2348
    %v2350 = vlaneseq
    %v2351 = vshrl.u32 %v2350, 7
    %v2352 = vsub.s32 0, %v2351
    %v2353 = vrot.slane %v2336, %v2352
    %v2354 = vmul.f32 %v2349, %v2353
    %v2355 = vlaneseq
    %v2356 = vshrl.u32 %v2355, 7
    %v2357 = vsub.s32 1, %v2356
    %v2358 = vrot.slane %v2336, %v2357
    %v2359 = vadd.f32 %v2354, %v2358
    %v2360 = vld [vmem:[%s15] sm:$0xff]
    %v2361 = vld [vmem:[%s15 + $0x8] sm:$0xff]
    %v2362 = vld [vmem:[%s15 + $0x10] sm:$0xff]
    %v2363 = vld [vmem:[%s15 + $0x18] sm:$0xff]
    %v2364 = vld [vmem:[%s16] sm:$0x1]
    %v2366 = vlaneseq
    %v2367 = vshrl.u32 %v2366, 7
    %v2368 = vsub.s32 0, %v2367
    %v2369 = vrot.slane %v2364, %v2368
    %v2372 = vsel %vm67, %v2359, 0
    %2374 = vmatprep.subr.mxu0 0.0
    %2375 = vmatpush1.msra.mxu0 %v2360
    %2376 = vmatprep.subr.mxu0 0.0
    %2377 = vmatpush1.msra.mxu0 %v2361
    %2378 = vmatprep.subr.mxu0 0.0
    %2379 = vmatpush1.msra.mxu0 %v2362
    %2380 = vmatprep.subr.mxu0 0.0
    %2381 = vmatpush1.msra.mxu0 %v2363
    %2382 = vmatprep.subr.mxu0 0.0
    %2383 = vmatpush1.msra.mxu0 0.0
    %2384 = vmatprep.subr.mxu0 0.0
    %2385 = vmatpush1.msra.mxu0 0.0
    %2386 = vmatprep.subr.mxu0 0.0
    %2387 = vmatpush1.msra.mxu0 0.0
    %2388 = vmatprep.subr.mxu0 0.0
    %2389 = vmatpush1.msra.mxu0 0.0
    %2390 = vmatprep.subr.mxu0 0.0
    %2391 = vmatpush1.msra.mxu0 0.0
    %2392 = vmatprep.subr.mxu0 0.0
    %2393 = vmatpush1.msra.mxu0 0.0
    %2394 = vmatprep.subr.mxu0 0.0
    %2395 = vmatpush1.msra.mxu0 0.0
    %2396 = vmatprep.subr.mxu0 0.0
    %2397 = vmatpush1.msra.mxu0 0.0
    %2398 = vmatprep.subr.mxu0 0.0
    %2399 = vmatpush1.msra.mxu0 0.0
    %2400 = vmatprep.subr.mxu0 0.0
    %2401 = vmatpush1.msra.mxu0 0.0
    %2402 = vmatprep.subr.mxu0 0.0
    %2403 = vmatpush1.msra.mxu0 0.0
    %2404 = vmatprep.subr.mxu0 0.0
    %2405 = vmatpush1.msra.mxu0 0.0
    %2406 = vmatprep.subr.mxu0 0.0
    %2407 = vmatpush1.msra.mxu0 0.0
    %2408 = vmatprep.subr.mxu0 0.0
    %2409 = vmatpush1.msra.mxu0 0.0
    %2410 = vmatprep.subr.mxu0 0.0
    %2411 = vmatpush1.msra.mxu0 0.0
    %2412 = vmatprep.subr.mxu0 0.0
    %2413 = vmatpush1.msra.mxu0 0.0
    %2414 = vmatprep.subr.mxu0 0.0
    %2415 = vmatpush1.msra.mxu0 0.0
    %2416 = vmatprep.subr.mxu0 0.0
    %2417 = vmatpush1.msra.mxu0 0.0
    %2418 = vmatprep.subr.mxu0 0.0
    %2419 = vmatpush1.msra.mxu0 0.0
    %2420 = vmatprep.subr.mxu0 0.0
    %2421 = vmatpush1.msra.mxu0 0.0
    %2422 = vmatprep.subr.mxu0 0.0
    %2423 = vmatpush1.msra.mxu0 0.0
    %2424 = vmatprep.subr.mxu0 0.0
    %2425 = vmatpush1.msra.mxu0 0.0
    %2426 = vmatprep.subr.mxu0 0.0
    %2427 = vmatpush1.msra.mxu0 0.0
    %2428 = vmatprep.subr.mxu0 0.0
    %2429 = vmatpush1.msra.mxu0 0.0
    %2430 = vmatprep.subr.mxu0 0.0
    %2431 = vmatpush1.msra.mxu0 0.0
    %2432 = vmatprep.subr.mxu0 0.0
    %2433 = vmatpush1.msra.mxu0 0.0
    %2434 = vmatprep.subr.mxu0 0.0
    %2435 = vmatpush1.msra.mxu0 0.0
    %2436 = vmatprep.subr.mxu0 0.0
    %2437 = vmatpush1.msra.mxu0 0.0
    %2438 = vmatprep.mubr.f32.mxu0 0.0
    %2439 = vmatmul.mubr.f32.gmra.mrb[0].mxu0 %v2372
    %v2440 = vpop.f32.mrb[0].mxu0
    %v2441 = vadd.f32 %v2369, %v2440
    %v2442 = vpop.f32.mrb[0].mxu0
    %2443 = vdwg.mxu0
    %vm2444 = vcmask 74752
    %2445 = vst.msk [vmem:[#allocation2] sm:$0x3] %vm2444, %v2441
    // Predicated region
    $region70: #{vit_features_forward.1} parent=1 // pred_check
      _
    $region71: #{vit_features_forward.1} parent=1 // pred_check_branch
      %2447 = sbr.rel (0) target = $region73
    $region72: #{vit_features_forward.1} parent=1 // pred_region
      %s2449 = ssub.s32 32, 32
      %2450 = vsyncadd [#allocation3], %s2449
      %s2452 = sshll.u32 [#allocation2], 4
      %s2453 = int_to_ptr.vmem [resolvable:$true] %s2452
      %2455 = dma.vmem_to_hbm [thread:$0]  %s2453, 32, %s17, [#allocation3]
    $region73: #{vit_features_forward.1} parent=1 // pred_fallthru
      _
    // Predicated region
    $region74: #{vit_features_forward.1} parent=1 // pred_check
      _
    $region75: #{vit_features_forward.1} parent=1 // pred_check_branch
      %2457 = sbr.rel (0) target = $region77
    $region76: #{vit_features_forward.1} parent=1 // pred_region
      %2458 = dma.done [#allocation3], 32
    $region77: #{vit_features_forward.1} parent=1 // pred_fallthru
      _
    %2459 = vsyncpa [#allocation3], 1

</llo_original>
